<compile_context>
chip_gen: v7x
topology: tpu7x:2x2x1
jax: 0.10.0
libtpu: 0.0.40
codegen_flags: <defaults>
</compile_context>

<pallas_src>
import numpy as np
import jax
import jax.numpy as jnp
from jax.experimental import pallas as pl
from jax.experimental.pallas import tpu as pltpu

# ----------------------- model hyper-parameters (small) -----------------------
B = 2                 # batch
M = 16                # IMG_size[0]
N = 16                # IMG_size[1]
MN = M * N
NCLASS = 10           # nCls
NCLS_PAD = 128        # lane-dense padded classifier width
NDIFRAC = 2           # nInterDifrac
FREQ_LIST = (0.3e12, 0.4e12)
NFREQ = len(FREQ_LIST)
INPUT_SCALE = 1.0     # config.input_scale

# DiffractiveLayer physical constants
DL = 0.02
DIST = 0.03
C_LIGHT = 3e8


def init_transfer_H(m, n, hz):
    """fftshifted free-space transfer function (unit modulus), per frequency."""
    lmb = C_LIGHT / hz
    k = 2.0 * np.pi / lmb
    df = 1.0 / DL
    ii = (np.arange(m) - m // 2) * df
    jj = (np.arange(n) - n // 2) * df
    ph = ii[:, None] ** 2 + jj[None, :] ** 2
    H = np.exp(1j * k * DIST) * np.exp(-1j * lmb * np.pi * DIST * ph)
    return np.fft.fftshift(H).astype(np.complex64)


def build_propagator_parts(H):
    """Real / imag parts of the FIXED linear operator (row-vector convention,
       y_flat = u_flat @ A):  u -> flatten(IFFT2(FFT2(u) * H)).
       The 1/(M*N) IFFT normalization is folded in."""
    m, n = H.shape
    E = np.eye(m * n, dtype=np.complex128).reshape(m * n, m, n)     # basis images
    prop = np.fft.ifft2(np.fft.fft2(E, axes=(-2, -1)) * H[None].astype(np.complex128),
                        axes=(-2, -1)).reshape(m * n, m * n)        # row i = prop(e_i)
    return prop.real.astype(np.float32), prop.imag.astype(np.float32)


# ------------------------------ Pallas kernel ---------------------------------
def _multi_dnet_kernel(x_ref, a0_ref, ar_ref, ai_ref, cos_ref, sin_ref,
                       wfreq_ref, wfc_ref, bfc_ref, o_ref):
    """Whole batch, all frequencies, all diffractive layers + fused (padded) FC classifier."""
    # input_trans: amp = sqrt(x * input_scale)          (B, MN) lane-dense, purely real
    amp = jnp.sqrt(x_ref[...] * jnp.float32(INPUT_SCALE))

    cos_all = cos_ref[...]                              # (NDIFRAC, MN) f32
    sin_all = sin_ref[...]

    # --- Layer 0, BOTH frequencies fused (initial imag part is exactly zero) ---
    # amp (B, MN) bf16  @  [Ar_0 | Ai_0 | Ar_1 | Ai_1] (MN, NFREQ*2*MN) bf16  -> f32
    v0 = jnp.dot(amp.astype(jnp.bfloat16), a0_ref[...],
                 preferred_element_type=jnp.float32)    # (B, NFREQ*2*MN)

    acc = jnp.zeros((B, MN), jnp.float32)

    c0 = cos_all[0:1, :]                                # (1, MN)
    s0 = sin_all[0:1, :]

    for f in range(NFREQ):                              # freq_nets (unrolled)
        base = f * 2 * MN                               # 128-aligned lane offsets (free slices)
        vr = v0[:, base:base + MN]
        vi = v0[:, base + MN:base + 2 * MN]
        # learned phase-only transmission exp(i*phase_0), shared across sub-nets (f32 VPU)
        ur = vr * c0 - vi * s0
        ui = vr * s0 + vi * c0

        for j in range(1, NDIFRAC):                     # remaining DiffractiveLayers (unrolled)
            # sublane-stack [ur; ui] so Ar_f / Ai_f weight pushes are shared by re & im rows
            lhs = jnp.concatenate([ur, ui], axis=0).astype(jnp.bfloat16)   # (2B, MN)
            p = jnp.dot(lhs, ar_ref[f], preferred_element_type=jnp.float32)  # [ur@Ar; ui@Ar]
            q = jnp.dot(lhs, ai_ref[f], preferred_element_type=jnp.float32)  # [ur@Ai; ui@Ai]
            vr = p[:B] - q[B:]                          # re = ur@Ar - ui@Ai
            vi = q[:B] + p[B:]                          # im = ur@Ai + ui@Ar
            cj = cos_all[j:j + 1, :]
            sj = sin_all[j:j + 1, :]
            ur = vr * cj - vi * sj
            ui = vr * sj + vi * cj

        # z_modulus(u) * wFreq[f]
        acc = acc + jnp.sqrt(ur * ur + ui * ui) * wfreq_ref[f]

    # do_classify (isFC): flatten is already the (B, MN) layout; lane-dense padded FC
    o_ref[...] = (jnp.dot(acc, wfc_ref[...], preferred_element_type=jnp.float32)
                  + bfc_ref[...])                       # (B, NCLS_PAD) unmasked store


# ------------------------------- wrapper ---------------------------------------
def multi_dnet_forward(x0, A0, Ar, Ai, cosP, sinP, wFreq, Wfc, bfc):
    # torch.flatten(x, 1) layout (row-major) -- layout plumbing only, done outside the kernel
    x_flat = x0.reshape(B, MN)

    # Pad the classifier to 128 lanes (zeros), slice back after the call.
    Wfc_pad = jnp.zeros((MN, NCLS_PAD), jnp.float32).at[:, :NCLASS].set(Wfc)
    bfc_pad = jnp.zeros((1, NCLS_PAD), jnp.float32).at[:, :NCLASS].set(bfc)

    out_pad = pl.pallas_call(
        _multi_dnet_kernel,
        out_shape=jax.ShapeDtypeStruct((B, NCLS_PAD), jnp.float32),
        grid=(1,),   # single step: whole batch at once (no per-sample grid overhead)
        in_specs=[
            pl.BlockSpec((B, MN), lambda i: (0, 0)),                       # x (flattened)
            pl.BlockSpec((MN, NFREQ * 2 * MN), lambda i: (0, 0)),          # layer-0 [Ar|Ai] both freqs
            pl.BlockSpec((NFREQ, MN, MN), lambda i: (0, 0, 0)),            # Ar_f (bf16)
            pl.BlockSpec((NFREQ, MN, MN), lambda i: (0, 0, 0)),            # Ai_f (bf16)
            pl.BlockSpec((NDIFRAC, MN), lambda i: (0, 0)),                 # cos(phase) lane-dense
            pl.BlockSpec((NDIFRAC, MN), lambda i: (0, 0)),                 # sin(phase) lane-dense
            pl.BlockSpec(memory_space=pltpu.MemorySpace.SMEM),             # wFreq scalars
            pl.BlockSpec((MN, NCLS_PAD), lambda i: (0, 0)),                # FC weight (padded)
            pl.BlockSpec((1, NCLS_PAD), lambda i: (0, 0)),                 # FC bias (padded)
        ],
        out_specs=pl.BlockSpec((B, NCLS_PAD), lambda i: (0, 0)),
        compiler_params=pltpu.CompilerParams(dimension_semantics=("arbitrary",)),
    )(x_flat, A0, Ar, Ai, cosP, sinP, wFreq, Wfc_pad, bfc_pad)

    return out_pad[:, :NCLASS]


# ------------------------------ reference (numpy) -------------------------------
def reference_numpy(x0, Hs, cosP3, sinP3, wfreq, Wfc, bfc):
    x0 = np.asarray(x0, np.float64)
    cosP3 = np.asarray(cosP3, np.float64)
    sinP3 = np.asarray(sinP3, np.float64)
    x_sum = np.zeros((B, M, N), np.float64)
    for f in range(NFREQ):
        u = np.sqrt(x0[:, 0] * INPUT_SCALE).astype(np.complex128)
        H = Hs[f].astype(np.complex128)
        for j in range(NDIFRAC):
            u = np.fft.ifft2(np.fft.fft2(u, axes=(-2, -1)) * H, axes=(-2, -1))
            u = u * (cosP3[j] + 1j * sinP3[j])
        x_sum += np.abs(u) * float(wfreq[f])
    flat = x_sum.reshape(B, M * N)
    return flat @ np.asarray(Wfc, np.float64) + np.asarray(bfc, np.float64)


# --------------------------------- main ----------------------------------------
if __name__ == "__main__":
    key = jax.random.PRNGKey(0)
    k_x, k_phase, k_w, k_b = jax.random.split(key, 4)

    # input (positive, since input_trans takes sqrt); nChannel must be 1
    x0 = jax.random.uniform(k_x, (B, 1, M, N), jnp.float32, minval=0.1, maxval=1.0)

    # learned transmission phases (shared across frequency sub-nets: shareWeight=True)
    phase = jax.random.uniform(k_phase, (NDIFRAC, M, N), jnp.float32,
                               minval=0.0, maxval=2.0 * np.pi)
    cos3 = jnp.cos(phase)
    sin3 = jnp.sin(phase)
    cosP = cos3.reshape(NDIFRAC, MN)      # lane-dense tables for the kernel
    sinP = sin3.reshape(NDIFRAC, MN)

    # wFreq = torch.ones(nFreq)
    wFreq = jnp.ones((NFREQ,), jnp.float32)

    # fc1 = nn.Linear(M*N, nClass)  ->  x @ W + b  (W = weight.T)
    bound = 1.0 / np.sqrt(MN)
    Wfc = jax.random.uniform(k_w, (MN, NCLASS), jnp.float32, minval=-bound, maxval=bound)
    bfc = jax.random.uniform(k_b, (1, NCLASS), jnp.float32, minval=-bound, maxval=bound)

    # fixed (non-learned) constants: per-frequency propagation operators (bf16 MXU operands)
    Hs = [init_transfer_H(M, N, hz) for hz in FREQ_LIST]
    parts = [build_propagator_parts(H) for H in Hs]                       # [(Ar_f, Ai_f)]
    Ar_np = np.stack([p[0] for p in parts])                               # (NFREQ, MN, MN) f32
    Ai_np = np.stack([p[1] for p in parts])
    # layer-0 fused operator for the purely-real initial state: [Ar_0 | Ai_0 | Ar_1 | Ai_1]
    A0_np = np.concatenate([np.concatenate([p[0], p[1]], axis=1) for p in parts], axis=1)

    Ar = jnp.asarray(Ar_np).astype(jnp.bfloat16)
    Ai = jnp.asarray(Ai_np).astype(jnp.bfloat16)
    A0 = jnp.asarray(A0_np).astype(jnp.bfloat16)                          # (MN, NFREQ*2*MN)

    out = multi_dnet_forward(x0, A0, Ar, Ai, cosP, sinP, wFreq, Wfc, bfc)
    out = jax.block_until_ready(out)

    ref = reference_numpy(x0, Hs, cos3, sin3, wFreq, Wfc, bfc)
    assert out.shape == (B, NCLASS) and out.dtype == jnp.float32
    # tolerance accounts for bf16 MXU operands (f32 accumulation) vs float64 FFT reference
    assert np.allclose(np.asarray(out), ref, rtol=2e-2, atol=2e-2), \
        f"max abs err = {np.max(np.abs(np.asarray(out) - ref))}"

    print("KERNEL_OK")
</pallas_src>

<mosaic_0001>
module attributes {stable_mosaic.version = 11 : i64} {
  func.func @_multi_dnet_kernel(%arg0: i32, %arg1: memref<2x256xf32, #tpu.memory_space<vmem>>, %arg2: memref<256x1024xbf16, #tpu.memory_space<vmem>>, %arg3: memref<2x256x256xbf16, #tpu.memory_space<vmem>>, %arg4: memref<2x256x256xbf16, #tpu.memory_space<vmem>>, %arg5: memref<2x256xf32, #tpu.memory_space<vmem>>, %arg6: memref<2x256xf32, #tpu.memory_space<vmem>>, %arg7: memref<2xf32, #tpu.memory_space<smem>>, %arg8: memref<256x128xf32, #tpu.memory_space<vmem>>, %arg9: memref<1x128xf32, #tpu.memory_space<vmem>>, %arg10: memref<2x128xf32, #tpu.memory_space<vmem>>) attributes {dimension_semantics = [#tpu.dimension_semantics<arbitrary>], iteration_bounds = array<i64: 1>, scalar_prefetch = 0 : i64, scratch_operands = 0 : i64, tpu.core_type = #tpu.core_type<tc>, window_params = [{pipeline_mode = #tpu.pipeline_mode<synchronous>, transform_indices = @transform_0, window_bounds = array<i64: 2, 256>}, {pipeline_mode = #tpu.pipeline_mode<synchronous>, transform_indices = @transform_1, window_bounds = array<i64: 256, 1024>}, {pipeline_mode = #tpu.pipeline_mode<synchronous>, transform_indices = @transform_2, window_bounds = array<i64: 2, 256, 256>}, {pipeline_mode = #tpu.pipeline_mode<synchronous>, transform_indices = @transform_3, window_bounds = array<i64: 2, 256, 256>}, {pipeline_mode = #tpu.pipeline_mode<synchronous>, transform_indices = @transform_4, window_bounds = array<i64: 2, 256>}, {pipeline_mode = #tpu.pipeline_mode<synchronous>, transform_indices = @transform_5, window_bounds = array<i64: 2, 256>}, {transform_indices = @transform_6, window_bounds = array<i64: 2>}, {pipeline_mode = #tpu.pipeline_mode<synchronous>, transform_indices = @transform_7, window_bounds = array<i64: 256, 128>}, {pipeline_mode = #tpu.pipeline_mode<synchronous>, transform_indices = @transform_8, window_bounds = array<i64: 1, 128>}, {pipeline_mode = #tpu.pipeline_mode<synchronous>, transform_indices = @transform_9, window_bounds = array<i64: 2, 128>}]} {
    %c0 = arith.constant 0 : index
    %c0_0 = arith.constant 0 : index
    %0 = vector.load %arg1[%c0, %c0_0] : memref<2x256xf32, #tpu.memory_space<vmem>>, vector<2x256xf32>
    %cst = arith.constant 1.000000e+00 : f32
    %1 = vector.broadcast %cst : f32 to vector<2x256xf32>
    %2 = arith.mulf %0, %1 : vector<2x256xf32>
    %3 = math.sqrt %2 : vector<2x256xf32>
    %c0_1 = arith.constant 0 : index
    %c0_2 = arith.constant 0 : index
    %4 = vector.load %arg5[%c0_1, %c0_2] : memref<2x256xf32, #tpu.memory_space<vmem>>, vector<2x256xf32>
    %c0_3 = arith.constant 0 : index
    %c0_4 = arith.constant 0 : index
    %5 = vector.load %arg6[%c0_3, %c0_4] : memref<2x256xf32, #tpu.memory_space<vmem>>, vector<2x256xf32>
    %6 = arith.truncf %3 : vector<2x256xf32> to vector<2x256xbf16>
    %c0_5 = arith.constant 0 : index
    %c0_6 = arith.constant 0 : index
    %7 = vector.load %arg2[%c0_5, %c0_6] : memref<256x1024xbf16, #tpu.memory_space<vmem>>, vector<256x1024xbf16>
    %cst_7 = arith.constant dense<0.000000e+00> : vector<2x1024xf32>
    %8 = tpu.matmul %6, %7, %cst_7 {dimension_numbers = #tpu.dot_dimension_numbers<[1], [0], [0], [1], [0, 0, 1, 1], [], []>} : vector<2x256xbf16>, vector<256x1024xbf16>, vector<2x1024xf32> -> vector<2x1024xf32>
    %cst_8 = arith.constant 0.000000e+00 : f32
    %9 = vector.broadcast %cst_8 : f32 to vector<2x256xf32>
    %10 = vector.extract_strided_slice %4 {offsets = [0, 0], sizes = [1, 256], strides = [1, 1]} : vector<2x256xf32> to vector<1x256xf32>
    %11 = vector.extract_strided_slice %5 {offsets = [0, 0], sizes = [1, 256], strides = [1, 1]} : vector<2x256xf32> to vector<1x256xf32>
    %12 = vector.extract_strided_slice %8 {offsets = [0, 0], sizes = [2, 256], strides = [1, 1]} : vector<2x1024xf32> to vector<2x256xf32>
    %13 = vector.extract_strided_slice %8 {offsets = [0, 256], sizes = [2, 256], strides = [1, 1]} : vector<2x1024xf32> to vector<2x256xf32>
    %14 = vector.broadcast %10 : vector<1x256xf32> to vector<2x256xf32>
    %15 = arith.mulf %12, %14 : vector<2x256xf32>
    %16 = vector.broadcast %11 : vector<1x256xf32> to vector<2x256xf32>
    %17 = arith.mulf %13, %16 : vector<2x256xf32>
    %18 = arith.subf %15, %17 : vector<2x256xf32>
    %19 = vector.broadcast %11 : vector<1x256xf32> to vector<2x256xf32>
    %20 = arith.mulf %12, %19 : vector<2x256xf32>
    %21 = vector.broadcast %10 : vector<1x256xf32> to vector<2x256xf32>
    %22 = arith.mulf %13, %21 : vector<2x256xf32>
    %23 = arith.addf %20, %22 : vector<2x256xf32>
    %24 = tpu.concatenate %18, %23 in 0 : vector<2x256xf32>, vector<2x256xf32> -> vector<4x256xf32>
    %25 = arith.truncf %24 : vector<4x256xf32> to vector<4x256xbf16>
    %c0_9 = arith.constant 0 : index
    %c0_10 = arith.constant 0 : index
    %c0_11 = arith.constant 0 : index
    %26 = vector.load %arg3[%c0_9, %c0_10, %c0_11] : memref<2x256x256xbf16, #tpu.memory_space<vmem>>, vector<1x256x256xbf16>
    %27 = vector.shape_cast %26 : vector<1x256x256xbf16> to vector<256x256xbf16>
    %cst_12 = arith.constant dense<0.000000e+00> : vector<4x256xf32>
    %28 = tpu.matmul %25, %27, %cst_12 {dimension_numbers = #tpu.dot_dimension_numbers<[1], [0], [0], [1], [0, 0, 1, 1], [], []>} : vector<4x256xbf16>, vector<256x256xbf16>, vector<4x256xf32> -> vector<4x256xf32>
    %c0_13 = arith.constant 0 : index
    %c0_14 = arith.constant 0 : index
    %c0_15 = arith.constant 0 : index
    %29 = vector.load %arg4[%c0_13, %c0_14, %c0_15] : memref<2x256x256xbf16, #tpu.memory_space<vmem>>, vector<1x256x256xbf16>
    %30 = vector.shape_cast %29 : vector<1x256x256xbf16> to vector<256x256xbf16>
    %cst_16 = arith.constant dense<0.000000e+00> : vector<4x256xf32>
    %31 = tpu.matmul %25, %30, %cst_16 {dimension_numbers = #tpu.dot_dimension_numbers<[1], [0], [0], [1], [0, 0, 1, 1], [], []>} : vector<4x256xbf16>, vector<256x256xbf16>, vector<4x256xf32> -> vector<4x256xf32>
    %32 = vector.extract_strided_slice %28 {offsets = [0, 0], sizes = [2, 256], strides = [1, 1]} : vector<4x256xf32> to vector<2x256xf32>
    %33 = vector.extract_strided_slice %31 {offsets = [2, 0], sizes = [2, 256], strides = [1, 1]} : vector<4x256xf32> to vector<2x256xf32>
    %34 = arith.subf %32, %33 : vector<2x256xf32>
    %35 = vector.extract_strided_slice %31 {offsets = [0, 0], sizes = [2, 256], strides = [1, 1]} : vector<4x256xf32> to vector<2x256xf32>
    %36 = vector.extract_strided_slice %28 {offsets = [2, 0], sizes = [2, 256], strides = [1, 1]} : vector<4x256xf32> to vector<2x256xf32>
    %37 = arith.addf %35, %36 : vector<2x256xf32>
    %38 = vector.extract_strided_slice %4 {offsets = [1, 0], sizes = [1, 256], strides = [1, 1]} : vector<2x256xf32> to vector<1x256xf32>
    %39 = vector.extract_strided_slice %5 {offsets = [1, 0], sizes = [1, 256], strides = [1, 1]} : vector<2x256xf32> to vector<1x256xf32>
    %40 = vector.broadcast %38 : vector<1x256xf32> to vector<2x256xf32>
    %41 = arith.mulf %34, %40 : vector<2x256xf32>
    %42 = vector.broadcast %39 : vector<1x256xf32> to vector<2x256xf32>
    %43 = arith.mulf %37, %42 : vector<2x256xf32>
    %44 = arith.subf %41, %43 : vector<2x256xf32>
    %45 = vector.broadcast %39 : vector<1x256xf32> to vector<2x256xf32>
    %46 = arith.mulf %34, %45 : vector<2x256xf32>
    %47 = vector.broadcast %38 : vector<1x256xf32> to vector<2x256xf32>
    %48 = arith.mulf %37, %47 : vector<2x256xf32>
    %49 = arith.addf %46, %48 : vector<2x256xf32>
    %50 = arith.mulf %44, %44 : vector<2x256xf32>
    %51 = arith.mulf %49, %49 : vector<2x256xf32>
    %52 = arith.addf %50, %51 : vector<2x256xf32>
    %53 = math.sqrt %52 : vector<2x256xf32>
    %c0_17 = arith.constant 0 : index
    %54 = memref.load %arg7[%c0_17] : memref<2xf32, #tpu.memory_space<smem>>
    %55 = vector.broadcast %54 : f32 to vector<2x256xf32>
    %56 = arith.mulf %53, %55 : vector<2x256xf32>
    %57 = arith.addf %9, %56 : vector<2x256xf32>
    %58 = vector.extract_strided_slice %8 {offsets = [0, 512], sizes = [2, 256], strides = [1, 1]} : vector<2x1024xf32> to vector<2x256xf32>
    %59 = vector.extract_strided_slice %8 {offsets = [0, 768], sizes = [2, 256], strides = [1, 1]} : vector<2x1024xf32> to vector<2x256xf32>
    %60 = vector.broadcast %10 : vector<1x256xf32> to vector<2x256xf32>
    %61 = arith.mulf %58, %60 : vector<2x256xf32>
    %62 = vector.broadcast %11 : vector<1x256xf32> to vector<2x256xf32>
    %63 = arith.mulf %59, %62 : vector<2x256xf32>
    %64 = arith.subf %61, %63 : vector<2x256xf32>
    %65 = vector.broadcast %11 : vector<1x256xf32> to vector<2x256xf32>
    %66 = arith.mulf %58, %65 : vector<2x256xf32>
    %67 = vector.broadcast %10 : vector<1x256xf32> to vector<2x256xf32>
    %68 = arith.mulf %59, %67 : vector<2x256xf32>
    %69 = arith.addf %66, %68 : vector<2x256xf32>
    %70 = tpu.concatenate %64, %69 in 0 : vector<2x256xf32>, vector<2x256xf32> -> vector<4x256xf32>
    %71 = arith.truncf %70 : vector<4x256xf32> to vector<4x256xbf16>
    %c1 = arith.constant 1 : index
    %c0_18 = arith.constant 0 : index
    %c0_19 = arith.constant 0 : index
    %72 = vector.load %arg3[%c1, %c0_18, %c0_19] : memref<2x256x256xbf16, #tpu.memory_space<vmem>>, vector<1x256x256xbf16>
    %73 = vector.shape_cast %72 : vector<1x256x256xbf16> to vector<256x256xbf16>
    %cst_20 = arith.constant dense<0.000000e+00> : vector<4x256xf32>
    %74 = tpu.matmul %71, %73, %cst_20 {dimension_numbers = #tpu.dot_dimension_numbers<[1], [0], [0], [1], [0, 0, 1, 1], [], []>} : vector<4x256xbf16>, vector<256x256xbf16>, vector<4x256xf32> -> vector<4x256xf32>
    %c1_21 = arith.constant 1 : index
    %c0_22 = arith.constant 0 : index
    %c0_23 = arith.constant 0 : index
    %75 = vector.load %arg4[%c1_21, %c0_22, %c0_23] : memref<2x256x256xbf16, #tpu.memory_space<vmem>>, vector<1x256x256xbf16>
    %76 = vector.shape_cast %75 : vector<1x256x256xbf16> to vector<256x256xbf16>
    %cst_24 = arith.constant dense<0.000000e+00> : vector<4x256xf32>
    %77 = tpu.matmul %71, %76, %cst_24 {dimension_numbers = #tpu.dot_dimension_numbers<[1], [0], [0], [1], [0, 0, 1, 1], [], []>} : vector<4x256xbf16>, vector<256x256xbf16>, vector<4x256xf32> -> vector<4x256xf32>
    %78 = vector.extract_strided_slice %74 {offsets = [0, 0], sizes = [2, 256], strides = [1, 1]} : vector<4x256xf32> to vector<2x256xf32>
    %79 = vector.extract_strided_slice %77 {offsets = [2, 0], sizes = [2, 256], strides = [1, 1]} : vector<4x256xf32> to vector<2x256xf32>
    %80 = arith.subf %78, %79 : vector<2x256xf32>
    %81 = vector.extract_strided_slice %77 {offsets = [0, 0], sizes = [2, 256], strides = [1, 1]} : vector<4x256xf32> to vector<2x256xf32>
    %82 = vector.extract_strided_slice %74 {offsets = [2, 0], sizes = [2, 256], strides = [1, 1]} : vector<4x256xf32> to vector<2x256xf32>
    %83 = arith.addf %81, %82 : vector<2x256xf32>
    %84 = vector.extract_strided_slice %4 {offsets = [1, 0], sizes = [1, 256], strides = [1, 1]} : vector<2x256xf32> to vector<1x256xf32>
    %85 = vector.extract_strided_slice %5 {offsets = [1, 0], sizes = [1, 256], strides = [1, 1]} : vector<2x256xf32> to vector<1x256xf32>
    %86 = vector.broadcast %84 : vector<1x256xf32> to vector<2x256xf32>
    %87 = arith.mulf %80, %86 : vector<2x256xf32>
    %88 = vector.broadcast %85 : vector<1x256xf32> to vector<2x256xf32>
    %89 = arith.mulf %83, %88 : vector<2x256xf32>
    %90 = arith.subf %87, %89 : vector<2x256xf32>
    %91 = vector.broadcast %85 : vector<1x256xf32> to vector<2x256xf32>
    %92 = arith.mulf %80, %91 : vector<2x256xf32>
    %93 = vector.broadcast %84 : vector<1x256xf32> to vector<2x256xf32>
    %94 = arith.mulf %83, %93 : vector<2x256xf32>
    %95 = arith.addf %92, %94 : vector<2x256xf32>
    %96 = arith.mulf %90, %90 : vector<2x256xf32>
    %97 = arith.mulf %95, %95 : vector<2x256xf32>
    %98 = arith.addf %96, %97 : vector<2x256xf32>
    %99 = math.sqrt %98 : vector<2x256xf32>
    %c1_25 = arith.constant 1 : index
    %100 = memref.load %arg7[%c1_25] : memref<2xf32, #tpu.memory_space<smem>>
    %101 = vector.broadcast %100 : f32 to vector<2x256xf32>
    %102 = arith.mulf %99, %101 : vector<2x256xf32>
    %103 = arith.addf %57, %102 : vector<2x256xf32>
    %c0_26 = arith.constant 0 : index
    %c0_27 = arith.constant 0 : index
    %104 = vector.load %arg8[%c0_26, %c0_27] : memref<256x128xf32, #tpu.memory_space<vmem>>, vector<256x128xf32>
    %cst_28 = arith.constant dense<0.000000e+00> : vector<2x128xf32>
    %105 = tpu.matmul %103, %104, %cst_28 {dimension_numbers = #tpu.dot_dimension_numbers<[1], [0], [0], [1], [0, 0, 1, 1], [], []>} : vector<2x256xf32>, vector<256x128xf32>, vector<2x128xf32> -> vector<2x128xf32>
    %c0_29 = arith.constant 0 : index
    %c0_30 = arith.constant 0 : index
    %106 = vector.load %arg9[%c0_29, %c0_30] : memref<1x128xf32, #tpu.memory_space<vmem>>, vector<1x128xf32>
    %107 = vector.broadcast %106 : vector<1x128xf32> to vector<2x128xf32>
    %108 = arith.addf %105, %107 : vector<2x128xf32>
    %c0_31 = arith.constant 0 : index
    %c0_32 = arith.constant 0 : index
    %109 = vector.load %arg10[%c0_31, %c0_32] : memref<2x128xf32, #tpu.memory_space<vmem>>, vector<2x128xf32>
    tpu.vector_store %arg10[%c0_31, %c0_32], %108 {strides = array<i32>} : memref<2x128xf32, #tpu.memory_space<vmem>>, vector<2x128xf32>,
    return
  }
  func.func @transform_0(%arg0: i32) -> (i32, i32) {
    %c0_i32 = arith.constant 0 : i32
    %c0_i32_0 = arith.constant 0 : i32
    %c0_i32_1 = arith.constant 0 : i32
    return %c0_i32, %c0_i32_0 : i32, i32
  }
  func.func @transform_1(%arg0: i32) -> (i32, i32) {
    %c0_i32 = arith.constant 0 : i32
    %c0_i32_0 = arith.constant 0 : i32
    %c0_i32_1 = arith.constant 0 : i32
    return %c0_i32, %c0_i32_0 : i32, i32
  }
  func.func @transform_2(%arg0: i32) -> (i32, i32, i32) {
    %c0_i32 = arith.constant 0 : i32
    %c0_i32_0 = arith.constant 0 : i32
    %c0_i32_1 = arith.constant 0 : i32
    %c0_i32_2 = arith.constant 0 : i32
    return %c0_i32, %c0_i32_0, %c0_i32_1 : i32, i32, i32
  }
  func.func @transform_3(%arg0: i32) -> (i32, i32, i32) {
    %c0_i32 = arith.constant 0 : i32
    %c0_i32_0 = arith.constant 0 : i32
    %c0_i32_1 = arith.constant 0 : i32
    %c0_i32_2 = arith.constant 0 : i32
    return %c0_i32, %c0_i32_0, %c0_i32_1 : i32, i32, i32
  }
  func.func @transform_4(%arg0: i32) -> (i32, i32) {
    %c0_i32 = arith.constant 0 : i32
    %c0_i32_0 = arith.constant 0 : i32
    %c0_i32_1 = arith.constant 0 : i32
    return %c0_i32, %c0_i32_0 : i32, i32
  }
  func.func @transform_5(%arg0: i32) -> (i32, i32) {
    %c0_i32 = arith.constant 0 : i32
    %c0_i32_0 = arith.constant 0 : i32
    %c0_i32_1 = arith.constant 0 : i32
    return %c0_i32, %c0_i32_0 : i32, i32
  }
  func.func @transform_6(%arg0: i32) -> i32 {
    %c0_i32 = arith.constant 0 : i32
    %c0_i32_0 = arith.constant 0 : i32
    return %c0_i32 : i32
  }
  func.func @transform_7(%arg0: i32) -> (i32, i32) {
    %c0_i32 = arith.constant 0 : i32
    %c0_i32_0 = arith.constant 0 : i32
    %c0_i32_1 = arith.constant 0 : i32
    return %c0_i32, %c0_i32_0 : i32, i32
  }
  func.func @transform_8(%arg0: i32) -> (i32, i32) {
    %c0_i32 = arith.constant 0 : i32
    %c0_i32_0 = arith.constant 0 : i32
    %c0_i32_1 = arith.constant 0 : i32
    return %c0_i32, %c0_i32_0 : i32, i32
  }
  func.func @transform_9(%arg0: i32) -> (i32, i32) {
    %c0_i32 = arith.constant 0 : i32
    %c0_i32_0 = arith.constant 0 : i32
    %c0_i32_1 = arith.constant 0 : i32
    return %c0_i32, %c0_i32_0 : i32, i32
  }
}

</mosaic_0001>

<llo_original>
// kernel: tpu_custom_call.1
$region0: #{tpu_custom_call.1}
  #allocation0 [shape = 'u32[]', space=smem, size = 0x4, offset = 0x4, fixed_abs, tag = 'smem constant byte address 0x4 - core index']
  #allocation1 [shape = 'u32[144,128]{1,0:T(1,128)}', space=vmem, size = 0x12000, scoped, tag = 'internal scratch']
  %s0 = inlined_call_operand.hbm [shape: f32[2,256], index: 0, kind: input, shape index: {}]
  %s1 = inlined_call_operand.hbm [shape: bf16[256,1024], index: 1, kind: input, shape index: {}]
  %s2 = inlined_call_operand.hbm [shape: bf16[2,256,256], index: 2, kind: input, shape index: {}]
  %s3 = inlined_call_operand.hbm [shape: bf16[2,256,256], index: 3, kind: input, shape index: {}]
  %s4 = inlined_call_operand.vmem [shape: f32[2,256], index: 4, kind: input, shape index: {}]
  %s5 = inlined_call_operand.vmem [shape: f32[2,256], index: 5, kind: input, shape index: {}]
  %s6 = inlined_call_operand.vmem [shape: f32[2], index: 6, kind: input, shape index: {}]
  %s7 = inlined_call_operand.hbm [shape: f32[256,128], index: 7, kind: input, shape index: {}]
  %s8 = inlined_call_operand.vmem [shape: f32[1,128], index: 8, kind: input, shape index: {}]
  %s9 = inlined_call_operand.hbm [shape: f32[2,128], index: 9, kind: output, shape index: {}]
  %s10 = sld [smem:[#allocation0]]
  $region70: #{tpu_custom_call.1} parent=0
    _
  %s12 = ssub.s32 1, %s10
  %s13 = scalar_select 0, %s12, %s10
  $region1: #{tpu_custom_call.1} parent=0
    #allocation2 [shape = 'u8[2048]{0}', space=vmem, size = 0x800, scoped, tag = 'input window, operand 0, single buffered']
    #allocation3 [shape = 's32[1]{0}', space=sflag, size = 0x4, scoped, tag = 'scoped memory for tpu_custom_call.1']
    #allocation4 [shape = 's32[1]{0}', space=sflag, size = 0x4, scoped, tag = 'scoped memory for tpu_custom_call.1']
    #allocation5 [shape = 's32[1]{0}', space=sflag, size = 0x4, scoped, tag = 'scoped memory for tpu_custom_call.1']
    #allocation6 [shape = 'u8[524288]{0}', space=vmem, size = 0x80000, scoped, tag = 'input window, operand 1, single buffered']
    #allocation7 [shape = 's32[1]{0}', space=sflag, size = 0x4, scoped, tag = 'scoped memory for tpu_custom_call.1']
    #allocation8 [shape = 'u8[262144]{0}', space=vmem, size = 0x40000, scoped, tag = 'input window, operand 2, single buffered']
    #allocation9 [shape = 'u8[262144]{0}', space=vmem, size = 0x40000, scoped, tag = 'input window, operand 3, single buffered']
    #allocation10 [shape = 's32[1]{0}', space=sflag, size = 0x4, scoped, tag = 'scoped memory for tpu_custom_call.1']
    #allocation11 [shape = 'u8[512]{0}', space=smem, size = 0x200, scoped, tag = 'input window, operand 6, single buffered']
    #allocation12 [shape = 'u8[131072]{0}', space=vmem, size = 0x20000, scoped, tag = 'input window, operand 7, single buffered']
    #allocation13 [shape = 'u8[1024]{0}', space=vmem, size = 0x400, scoped, tag = 'output window, operand 0, single buffered']
    %14 = vsyncpa [#allocation3], 0
    %15 = vsyncpa [#allocation7], 0
    %16 = vsyncpa [#allocation10], 0
    %17 = vsyncpa [#allocation5], 0
    %18 = vsyncpa [#allocation4], 0
    // Predicated region
    $region2: #{tpu_custom_call.1} parent=1 // pred_check
      _
    $region3: #{tpu_custom_call.1} parent=1 // pred_check_branch
      %20 = sbr.rel (0) target = $region5
    $region4: #{tpu_custom_call.1} parent=1 // pred_region
      %s22 = ssub.s32 64, 64
      %23 = vsyncadd [#allocation3], %s22
      %s25 = sshll.u32 [#allocation2], 4
      %s26 = int_to_ptr.vmem [resolvable:$true] %s25
      %28 = dma.hbm_to_vmem [thread:$0]  %s0, 64, %s26, [#allocation3]
    $region5: #{tpu_custom_call.1} parent=1 // pred_fallthru
      _
    // Predicated region
    $region6: #{tpu_custom_call.1} parent=1 // pred_check
      _
    $region7: #{tpu_custom_call.1} parent=1 // pred_check_branch
      %30 = sbr.rel (0) target = $region9
    $region8: #{tpu_custom_call.1} parent=1 // pred_region
      %s32 = ssub.s32 16384, 16384
      %33 = vsyncadd [#allocation7], %s32
      %s34 = sshll.u32 [#allocation6], 4
      %s35 = int_to_ptr.vmem [resolvable:$true] %s34
      %40 = dma.hbm_to_vmem [thread:$0]  %s1, 16384, %s35, [#allocation7], 512, 512, 32
    $region9: #{tpu_custom_call.1} parent=1 // pred_fallthru
      _
    // Predicated region
    $region10: #{tpu_custom_call.1} parent=1 // pred_check
      _
    $region11: #{tpu_custom_call.1} parent=1 // pred_check_branch
      %42 = sbr.rel (0) target = $region13
    $region12: #{tpu_custom_call.1} parent=1 // pred_region
      %s44 = ssub.s32 8192, 8192
      %45 = vsyncadd [#allocation7], %s44
      %s46 = sshll.u32 [#allocation8], 4
      %s47 = int_to_ptr.vmem [resolvable:$true] %s46
      %52 = dma.hbm_to_vmem [thread:$0]  %s2, 8192, %s47, [#allocation7], 128, 128, 8
    $region13: #{tpu_custom_call.1} parent=1 // pred_fallthru
      _
    // Predicated region
    $region14: #{tpu_custom_call.1} parent=1 // pred_check
      _
    $region15: #{tpu_custom_call.1} parent=1 // pred_check_branch
      %54 = sbr.rel (0) target = $region17
    $region16: #{tpu_custom_call.1} parent=1 // pred_region
      %s56 = ssub.s32 8192, 8192
      %57 = vsyncadd [#allocation10], %s56
      %s58 = sshll.u32 [#allocation9], 4
      %s59 = int_to_ptr.vmem [resolvable:$true] %s58
      %64 = dma.hbm_to_vmem [thread:$0]  %s3, 8192, %s59, [#allocation10], 128, 128, 8
    $region17: #{tpu_custom_call.1} parent=1 // pred_fallthru
      _
    // Predicated region
    $region18: #{tpu_custom_call.1} parent=1 // pred_check
      _
    $region19: #{tpu_custom_call.1} parent=1 // pred_check_branch
      %66 = sbr.rel (0) target = $region21
    $region20: #{tpu_custom_call.1} parent=1 // pred_region
      _
    $region21: #{tpu_custom_call.1} parent=1 // pred_fallthru
      _
    // Predicated region
    $region22: #{tpu_custom_call.1} parent=1 // pred_check
      _
    $region23: #{tpu_custom_call.1} parent=1 // pred_check_branch
      %68 = sbr.rel (0) target = $region25
    $region24: #{tpu_custom_call.1} parent=1 // pred_region
      _
    $region25: #{tpu_custom_call.1} parent=1 // pred_fallthru
      _
    // Predicated region
    $region26: #{tpu_custom_call.1} parent=1 // pred_check
      _
    $region27: #{tpu_custom_call.1} parent=1 // pred_check_branch
      %70 = sbr.rel (0) target = $region29
    $region28: #{tpu_custom_call.1} parent=1 // pred_region
      %s72 = ssub.s32 16, 16
      %73 = vsyncadd [#allocation5], %s72
      %s75 = sshll.u32 %s6, 4
      %s76 = int_to_ptr.vmem [resolvable:$true] %s75
      %78 = dma.vmem_to_smem %s76, 16, [#allocation11], [#allocation5]
    $region29: #{tpu_custom_call.1} parent=1 // pred_fallthru
      _
    // Predicated region
    $region30: #{tpu_custom_call.1} parent=1 // pred_check
      _
    $region31: #{tpu_custom_call.1} parent=1 // pred_check_branch
      %80 = sbr.rel (0) target = $region33
    $region32: #{tpu_custom_call.1} parent=1 // pred_region
      %s82 = ssub.s32 4096, 4096
      %83 = vsyncadd [#allocation10], %s82
      %s84 = sshll.u32 [#allocation12], 4
      %s85 = int_to_ptr.vmem [resolvable:$true] %s84
      %90 = dma.hbm_to_vmem [thread:$0]  %s7, 4096, %s85, [#allocation10], 128, 128, 8
    $region33: #{tpu_custom_call.1} parent=1 // pred_fallthru
      _
    // Predicated region
    $region34: #{tpu_custom_call.1} parent=1 // pred_check
      _
    $region35: #{tpu_custom_call.1} parent=1 // pred_check_branch
      %92 = sbr.rel (0) target = $region37
    $region36: #{tpu_custom_call.1} parent=1 // pred_region
      _
    $region37: #{tpu_custom_call.1} parent=1 // pred_fallthru
      _
    // Predicated region
    $region38: #{tpu_custom_call.1} parent=1 // pred_check
      _
    $region39: #{tpu_custom_call.1} parent=1 // pred_check_branch
      %94 = sbr.rel (0) target = $region41
    $region40: #{tpu_custom_call.1} parent=1 // pred_region
      %95 = dma.done [#allocation3], 64
    $region41: #{tpu_custom_call.1} parent=1 // pred_fallthru
      _
    // Predicated region
    $region42: #{tpu_custom_call.1} parent=1 // pred_check
      _
    $region43: #{tpu_custom_call.1} parent=1 // pred_check_branch
      %97 = sbr.rel (0) target = $region45
    $region44: #{tpu_custom_call.1} parent=1 // pred_region
      %98 = dma.done [#allocation7], 16384
    $region45: #{tpu_custom_call.1} parent=1 // pred_fallthru
      _
    // Predicated region
    $region46: #{tpu_custom_call.1} parent=1 // pred_check
      _
    $region47: #{tpu_custom_call.1} parent=1 // pred_check_branch
      %100 = sbr.rel (0) target = $region49
    $region48: #{tpu_custom_call.1} parent=1 // pred_region
      %101 = dma.done [#allocation7], 8192
    $region49: #{tpu_custom_call.1} parent=1 // pred_fallthru
      _
    // Predicated region
    $region50: #{tpu_custom_call.1} parent=1 // pred_check
      _
    $region51: #{tpu_custom_call.1} parent=1 // pred_check_branch
      %103 = sbr.rel (0) target = $region53
    $region52: #{tpu_custom_call.1} parent=1 // pred_region
      %104 = dma.done [#allocation10], 8192
    $region53: #{tpu_custom_call.1} parent=1 // pred_fallthru
      _
    // Predicated region
    $region54: #{tpu_custom_call.1} parent=1 // pred_check
      _
    $region55: #{tpu_custom_call.1} parent=1 // pred_check_branch
      %106 = sbr.rel (0) target = $region57
    $region56: #{tpu_custom_call.1} parent=1 // pred_region
      %107 = dma.done [#allocation5], 16
    $region57: #{tpu_custom_call.1} parent=1 // pred_fallthru
      _
    // Predicated region
    $region58: #{tpu_custom_call.1} parent=1 // pred_check
      _
    $region59: #{tpu_custom_call.1} parent=1 // pred_check_branch
      %109 = sbr.rel (0) target = $region61
    $region60: #{tpu_custom_call.1} parent=1 // pred_region
      %110 = dma.done [#allocation10], 4096
    $region61: #{tpu_custom_call.1} parent=1 // pred_fallthru
      _
    %111 = sfence
    %v112 = vld [vmem:[#allocation2] sm:$0xf]
    %v113 = vrsqrt.pop %v112
    %v114 = vmul.f32 %v112, %v113
    %vm115 = vcmp.eq.f32.partialorder %v112, inf
    %v116 = vsel %vm115, %v112, %v114
    %vm117 = vcmp.eq.f32.partialorder %v112, 0.0
    %v118 = vand.u32 %v112, 2147483648
    %v119 = vsel %vm117, %v118, %v116
    %v120 = vld [vmem:[%s4] sm:$0xf]
    %v121 = vld [vmem:[%s5] sm:$0xf]
    %v124 = vunpack.c.l.s4 1983009808
    %v125 = vunpack.c.0.s8 %v124
    %v126 = vlaneseq
    %v127 = vshrl.u32 %v126, 7
    %v128 = vsub.s32 %v125, %v127
    %v129 = vrot.slane %v119, %v128
    %v130 = vcombine.high %v129, %v129
    %v133 = vpack.c.bf16 %v129, %v129
    %v134 = vpack.c.bf16 %v130, %v130
    %v135 = vld [vmem:[#allocation6] sm:$0xff]
    %v136 = vld [vmem:[#allocation6 + $0x8] sm:$0xff]
    %v137 = vld [vmem:[#allocation6 + $0x10] sm:$0xff]
    %v138 = vld [vmem:[#allocation6 + $0x18] sm:$0xff]
    %v139 = vld [vmem:[#allocation6 + $0x20] sm:$0xff]
    %v140 = vld [vmem:[#allocation6 + $0x28] sm:$0xff]
    %v141 = vld [vmem:[#allocation6 + $0x30] sm:$0xff]
    %v142 = vld [vmem:[#allocation6 + $0x38] sm:$0xff]
    %v143 = vld [vmem:[#allocation6 + $0x40] sm:$0xff]
    %v144 = vld [vmem:[#allocation6 + $0x48] sm:$0xff]
    %v145 = vld [vmem:[#allocation6 + $0x50] sm:$0xff]
    %v146 = vld [vmem:[#allocation6 + $0x58] sm:$0xff]
    %v147 = vld [vmem:[#allocation6 + $0x60] sm:$0xff]
    %v148 = vld [vmem:[#allocation6 + $0x68] sm:$0xff]
    %v149 = vld [vmem:[#allocation6 + $0x70] sm:$0xff]
    %v150 = vld [vmem:[#allocation6 + $0x78] sm:$0xff]
    %v151 = vld [vmem:[#allocation6 + $0x80] sm:$0xff]
    %v152 = vld [vmem:[#allocation6 + $0x88] sm:$0xff]
    %v153 = vld [vmem:[#allocation6 + $0x90] sm:$0xff]
    %v154 = vld [vmem:[#allocation6 + $0x98] sm:$0xff]
    %v155 = vld [vmem:[#allocation6 + $0xa0] sm:$0xff]
    %v156 = vld [vmem:[#allocation6 + $0xa8] sm:$0xff]
    %v157 = vld [vmem:[#allocation6 + $0xb0] sm:$0xff]
    %v158 = vld [vmem:[#allocation6 + $0xb8] sm:$0xff]
    %v159 = vld [vmem:[#allocation6 + $0xc0] sm:$0xff]
    %v160 = vld [vmem:[#allocation6 + $0xc8] sm:$0xff]
    %v161 = vld [vmem:[#allocation6 + $0xd0] sm:$0xff]
    %v162 = vld [vmem:[#allocation6 + $0xd8] sm:$0xff]
    %v163 = vld [vmem:[#allocation6 + $0xe0] sm:$0xff]
    %v164 = vld [vmem:[#allocation6 + $0xe8] sm:$0xff]
    %v165 = vld [vmem:[#allocation6 + $0xf0] sm:$0xff]
    %v166 = vld [vmem:[#allocation6 + $0xf8] sm:$0xff]
    %v167 = vld [vmem:[#allocation6 + $0x100] sm:$0xff]
    %v168 = vld [vmem:[#allocation6 + $0x108] sm:$0xff]
    %v169 = vld [vmem:[#allocation6 + $0x110] sm:$0xff]
    %v170 = vld [vmem:[#allocation6 + $0x118] sm:$0xff]
    %v171 = vld [vmem:[#allocation6 + $0x120] sm:$0xff]
    %v172 = vld [vmem:[#allocation6 + $0x128] sm:$0xff]
    %v173 = vld [vmem:[#allocation6 + $0x130] sm:$0xff]
    %v174 = vld [vmem:[#allocation6 + $0x138] sm:$0xff]
    %v175 = vld [vmem:[#allocation6 + $0x140] sm:$0xff]
    %v176 = vld [vmem:[#allocation6 + $0x148] sm:$0xff]
    %v177 = vld [vmem:[#allocation6 + $0x150] sm:$0xff]
    %v178 = vld [vmem:[#allocation6 + $0x158] sm:$0xff]
    %v179 = vld [vmem:[#allocation6 + $0x160] sm:$0xff]
    %v180 = vld [vmem:[#allocation6 + $0x168] sm:$0xff]
    %v181 = vld [vmem:[#allocation6 + $0x170] sm:$0xff]
    %v182 = vld [vmem:[#allocation6 + $0x178] sm:$0xff]
    %v183 = vld [vmem:[#allocation6 + $0x180] sm:$0xff]
    %v184 = vld [vmem:[#allocation6 + $0x188] sm:$0xff]
    %v185 = vld [vmem:[#allocation6 + $0x190] sm:$0xff]
    %v186 = vld [vmem:[#allocation6 + $0x198] sm:$0xff]
    %v187 = vld [vmem:[#allocation6 + $0x1a0] sm:$0xff]
    %v188 = vld [vmem:[#allocation6 + $0x1a8] sm:$0xff]
    %v189 = vld [vmem:[#allocation6 + $0x1b0] sm:$0xff]
    %v190 = vld [vmem:[#allocation6 + $0x1b8] sm:$0xff]
    %v191 = vld [vmem:[#allocation6 + $0x1c0] sm:$0xff]
    %v192 = vld [vmem:[#allocation6 + $0x1c8] sm:$0xff]
    %v193 = vld [vmem:[#allocation6 + $0x1d0] sm:$0xff]
    %v194 = vld [vmem:[#allocation6 + $0x1d8] sm:$0xff]
    %v195 = vld [vmem:[#allocation6 + $0x1e0] sm:$0xff]
    %v196 = vld [vmem:[#allocation6 + $0x1e8] sm:$0xff]
    %v197 = vld [vmem:[#allocation6 + $0x1f0] sm:$0xff]
    %v198 = vld [vmem:[#allocation6 + $0x1f8] sm:$0xff]
    %v199 = vld [vmem:[#allocation6 + $0x200] sm:$0xff]
    %v200 = vld [vmem:[#allocation6 + $0x208] sm:$0xff]
    %v201 = vld [vmem:[#allocation6 + $0x210] sm:$0xff]
    %v202 = vld [vmem:[#allocation6 + $0x218] sm:$0xff]
    %v203 = vld [vmem:[#allocation6 + $0x220] sm:$0xff]
    %v204 = vld [vmem:[#allocation6 + $0x228] sm:$0xff]
    %v205 = vld [vmem:[#allocation6 + $0x230] sm:$0xff]
    %v206 = vld [vmem:[#allocation6 + $0x238] sm:$0xff]
    %v207 = vld [vmem:[#allocation6 + $0x240] sm:$0xff]
    %v208 = vld [vmem:[#allocation6 + $0x248] sm:$0xff]
    %v209 = vld [vmem:[#allocation6 + $0x250] sm:$0xff]
    %v210 = vld [vmem:[#allocation6 + $0x258] sm:$0xff]
    %v211 = vld [vmem:[#allocation6 + $0x260] sm:$0xff]
    %v212 = vld [vmem:[#allocation6 + $0x268] sm:$0xff]
    %v213 = vld [vmem:[#allocation6 + $0x270] sm:$0xff]
    %v214 = vld [vmem:[#allocation6 + $0x278] sm:$0xff]
    %v215 = vld [vmem:[#allocation6 + $0x280] sm:$0xff]
    %v216 = vld [vmem:[#allocation6 + $0x288] sm:$0xff]
    %v217 = vld [vmem:[#allocation6 + $0x290] sm:$0xff]
    %v218 = vld [vmem:[#allocation6 + $0x298] sm:$0xff]
    %v219 = vld [vmem:[#allocation6 + $0x2a0] sm:$0xff]
    %v220 = vld [vmem:[#allocation6 + $0x2a8] sm:$0xff]
    %v221 = vld [vmem:[#allocation6 + $0x2b0] sm:$0xff]
    %v222 = vld [vmem:[#allocation6 + $0x2b8] sm:$0xff]
    %v223 = vld [vmem:[#allocation6 + $0x2c0] sm:$0xff]
    %v224 = vld [vmem:[#allocation6 + $0x2c8] sm:$0xff]
    %v225 = vld [vmem:[#allocation6 + $0x2d0] sm:$0xff]
    %v226 = vld [vmem:[#allocation6 + $0x2d8] sm:$0xff]
    %v227 = vld [vmem:[#allocation6 + $0x2e0] sm:$0xff]
    %v228 = vld [vmem:[#allocation6 + $0x2e8] sm:$0xff]
    %v229 = vld [vmem:[#allocation6 + $0x2f0] sm:$0xff]
    %v230 = vld [vmem:[#allocation6 + $0x2f8] sm:$0xff]
    %v231 = vld [vmem:[#allocation6 + $0x300] sm:$0xff]
    %v232 = vld [vmem:[#allocation6 + $0x308] sm:$0xff]
    %v233 = vld [vmem:[#allocation6 + $0x310] sm:$0xff]
    %v234 = vld [vmem:[#allocation6 + $0x318] sm:$0xff]
    %v235 = vld [vmem:[#allocation6 + $0x320] sm:$0xff]
    %v236 = vld [vmem:[#allocation6 + $0x328] sm:$0xff]
    %v237 = vld [vmem:[#allocation6 + $0x330] sm:$0xff]
    %v238 = vld [vmem:[#allocation6 + $0x338] sm:$0xff]
    %v239 = vld [vmem:[#allocation6 + $0x340] sm:$0xff]
    %v240 = vld [vmem:[#allocation6 + $0x348] sm:$0xff]
    %v241 = vld [vmem:[#allocation6 + $0x350] sm:$0xff]
    %v242 = vld [vmem:[#allocation6 + $0x358] sm:$0xff]
    %v243 = vld [vmem:[#allocation6 + $0x360] sm:$0xff]
    %v244 = vld [vmem:[#allocation6 + $0x368] sm:$0xff]
    %v245 = vld [vmem:[#allocation6 + $0x370] sm:$0xff]
    %v246 = vld [vmem:[#allocation6 + $0x378] sm:$0xff]
    %v247 = vld [vmem:[#allocation6 + $0x380] sm:$0xff]
    %v248 = vld [vmem:[#allocation6 + $0x388] sm:$0xff]
    %v249 = vld [vmem:[#allocation6 + $0x390] sm:$0xff]
    %v250 = vld [vmem:[#allocation6 + $0x398] sm:$0xff]
    %v251 = vld [vmem:[#allocation6 + $0x3a0] sm:$0xff]
    %v252 = vld [vmem:[#allocation6 + $0x3a8] sm:$0xff]
    %v253 = vld [vmem:[#allocation6 + $0x3b0] sm:$0xff]
    %v254 = vld [vmem:[#allocation6 + $0x3b8] sm:$0xff]
    %v255 = vld [vmem:[#allocation6 + $0x3c0] sm:$0xff]
    %v256 = vld [vmem:[#allocation6 + $0x3c8] sm:$0xff]
    %v257 = vld [vmem:[#allocation6 + $0x3d0] sm:$0xff]
    %v258 = vld [vmem:[#allocation6 + $0x3d8] sm:$0xff]
    %v259 = vld [vmem:[#allocation6 + $0x3e0] sm:$0xff]
    %v260 = vld [vmem:[#allocation6 + $0x3e8] sm:$0xff]
    %v261 = vld [vmem:[#allocation6 + $0x3f0] sm:$0xff]
    %v262 = vld [vmem:[#allocation6 + $0x3f8] sm:$0xff]
    %v391 = vunpack.c.l.b16 %v135
    %v392 = vunpack.c.h.b16 %v135
    %v393 = vunpack.c.l.b16 %v136
    %v394 = vunpack.c.h.b16 %v136
    %v395 = vunpack.c.l.b16 %v137
    %v396 = vunpack.c.h.b16 %v137
    %v397 = vunpack.c.l.b16 %v138
    %v398 = vunpack.c.h.b16 %v138
    %v399 = vunpack.c.l.b16 %v139
    %v400 = vunpack.c.h.b16 %v139
    %v401 = vunpack.c.l.b16 %v140
    %v402 = vunpack.c.h.b16 %v140
    %v403 = vunpack.c.l.b16 %v141
    %v404 = vunpack.c.h.b16 %v141
    %v405 = vunpack.c.l.b16 %v142
    %v406 = vunpack.c.h.b16 %v142
    %v407 = vunpack.c.l.b16 %v143
    %v408 = vunpack.c.h.b16 %v143
    %v409 = vunpack.c.l.b16 %v144
    %v410 = vunpack.c.h.b16 %v144
    %v411 = vunpack.c.l.b16 %v145
    %v412 = vunpack.c.h.b16 %v145
    %v413 = vunpack.c.l.b16 %v146
    %v414 = vunpack.c.h.b16 %v146
    %v415 = vunpack.c.l.b16 %v147
    %v416 = vunpack.c.h.b16 %v147
    %v417 = vunpack.c.l.b16 %v148
    %v418 = vunpack.c.h.b16 %v148
    %v419 = vunpack.c.l.b16 %v149
    %v420 = vunpack.c.h.b16 %v149
    %v421 = vunpack.c.l.b16 %v150
    %v422 = vunpack.c.h.b16 %v150
    %v423 = vunpack.c.l.b16 %v151
    %v424 = vunpack.c.h.b16 %v151
    %v425 = vunpack.c.l.b16 %v152
    %v426 = vunpack.c.h.b16 %v152
    %v427 = vunpack.c.l.b16 %v153
    %v428 = vunpack.c.h.b16 %v153
    %v429 = vunpack.c.l.b16 %v154
    %v430 = vunpack.c.h.b16 %v154
    %v431 = vunpack.c.l.b16 %v155
    %v432 = vunpack.c.h.b16 %v155
    %v433 = vunpack.c.l.b16 %v156
    %v434 = vunpack.c.h.b16 %v156
    %v435 = vunpack.c.l.b16 %v157
    %v436 = vunpack.c.h.b16 %v157
    %v437 = vunpack.c.l.b16 %v158
    %v438 = vunpack.c.h.b16 %v158
    %v439 = vunpack.c.l.b16 %v159
    %v440 = vunpack.c.h.b16 %v159
    %v441 = vunpack.c.l.b16 %v160
    %v442 = vunpack.c.h.b16 %v160
    %v443 = vunpack.c.l.b16 %v161
    %v444 = vunpack.c.h.b16 %v161
    %v445 = vunpack.c.l.b16 %v162
    %v446 = vunpack.c.h.b16 %v162
    %v447 = vunpack.c.l.b16 %v163
    %v448 = vunpack.c.h.b16 %v163
    %v449 = vunpack.c.l.b16 %v164
    %v450 = vunpack.c.h.b16 %v164
    %v451 = vunpack.c.l.b16 %v165
    %v452 = vunpack.c.h.b16 %v165
    %v453 = vunpack.c.l.b16 %v166
    %v454 = vunpack.c.h.b16 %v166
    %v455 = vunpack.c.l.b16 %v167
    %v456 = vunpack.c.h.b16 %v167
    %v457 = vunpack.c.l.b16 %v168
    %v458 = vunpack.c.h.b16 %v168
    %v459 = vunpack.c.l.b16 %v169
    %v460 = vunpack.c.h.b16 %v169
    %v461 = vunpack.c.l.b16 %v170
    %v462 = vunpack.c.h.b16 %v170
    %v463 = vunpack.c.l.b16 %v171
    %v464 = vunpack.c.h.b16 %v171
    %v465 = vunpack.c.l.b16 %v172
    %v466 = vunpack.c.h.b16 %v172
    %v467 = vunpack.c.l.b16 %v173
    %v468 = vunpack.c.h.b16 %v173
    %v469 = vunpack.c.l.b16 %v174
    %v470 = vunpack.c.h.b16 %v174
    %v471 = vunpack.c.l.b16 %v175
    %v472 = vunpack.c.h.b16 %v175
    %v473 = vunpack.c.l.b16 %v176
    %v474 = vunpack.c.h.b16 %v176
    %v475 = vunpack.c.l.b16 %v177
    %v476 = vunpack.c.h.b16 %v177
    %v477 = vunpack.c.l.b16 %v178
    %v478 = vunpack.c.h.b16 %v178
    %v479 = vunpack.c.l.b16 %v179
    %v480 = vunpack.c.h.b16 %v179
    %v481 = vunpack.c.l.b16 %v180
    %v482 = vunpack.c.h.b16 %v180
    %v483 = vunpack.c.l.b16 %v181
    %v484 = vunpack.c.h.b16 %v181
    %v485 = vunpack.c.l.b16 %v182
    %v486 = vunpack.c.h.b16 %v182
    %v487 = vunpack.c.l.b16 %v183
    %v488 = vunpack.c.h.b16 %v183
    %v489 = vunpack.c.l.b16 %v184
    %v490 = vunpack.c.h.b16 %v184
    %v491 = vunpack.c.l.b16 %v185
    %v492 = vunpack.c.h.b16 %v185
    %v493 = vunpack.c.l.b16 %v186
    %v494 = vunpack.c.h.b16 %v186
    %v495 = vunpack.c.l.b16 %v187
    %v496 = vunpack.c.h.b16 %v187
    %v497 = vunpack.c.l.b16 %v188
    %v498 = vunpack.c.h.b16 %v188
    %v499 = vunpack.c.l.b16 %v189
    %v500 = vunpack.c.h.b16 %v189
    %v501 = vunpack.c.l.b16 %v190
    %v502 = vunpack.c.h.b16 %v190
    %v503 = vunpack.c.l.b16 %v191
    %v504 = vunpack.c.h.b16 %v191
    %v505 = vunpack.c.l.b16 %v192
    %v506 = vunpack.c.h.b16 %v192
    %v507 = vunpack.c.l.b16 %v193
    %v508 = vunpack.c.h.b16 %v193
    %v509 = vunpack.c.l.b16 %v194
    %v510 = vunpack.c.h.b16 %v194
    %v511 = vunpack.c.l.b16 %v195
    %v512 = vunpack.c.h.b16 %v195
    %v513 = vunpack.c.l.b16 %v196
    %v514 = vunpack.c.h.b16 %v196
    %v515 = vunpack.c.l.b16 %v197
    %v516 = vunpack.c.h.b16 %v197
    %v517 = vunpack.c.l.b16 %v198
    %v518 = vunpack.c.h.b16 %v198
    %v519 = vunpack.c.l.b16 %v199
    %v520 = vunpack.c.h.b16 %v199
    %v521 = vunpack.c.l.b16 %v200
    %v522 = vunpack.c.h.b16 %v200
    %v523 = vunpack.c.l.b16 %v201
    %v524 = vunpack.c.h.b16 %v201
    %v525 = vunpack.c.l.b16 %v202
    %v526 = vunpack.c.h.b16 %v202
    %v527 = vunpack.c.l.b16 %v203
    %v528 = vunpack.c.h.b16 %v203
    %v529 = vunpack.c.l.b16 %v204
    %v530 = vunpack.c.h.b16 %v204
    %v531 = vunpack.c.l.b16 %v205
    %v532 = vunpack.c.h.b16 %v205
    %v533 = vunpack.c.l.b16 %v206
    %v534 = vunpack.c.h.b16 %v206
    %v535 = vunpack.c.l.b16 %v207
    %v536 = vunpack.c.h.b16 %v207
    %v537 = vunpack.c.l.b16 %v208
    %v538 = vunpack.c.h.b16 %v208
    %v539 = vunpack.c.l.b16 %v209
    %v540 = vunpack.c.h.b16 %v209
    %v541 = vunpack.c.l.b16 %v210
    %v542 = vunpack.c.h.b16 %v210
    %v543 = vunpack.c.l.b16 %v211
    %v544 = vunpack.c.h.b16 %v211
    %v545 = vunpack.c.l.b16 %v212
    %v546 = vunpack.c.h.b16 %v212
    %v547 = vunpack.c.l.b16 %v213
    %v548 = vunpack.c.h.b16 %v213
    %v549 = vunpack.c.l.b16 %v214
    %v550 = vunpack.c.h.b16 %v214
    %v551 = vunpack.c.l.b16 %v215
    %v552 = vunpack.c.h.b16 %v215
    %v553 = vunpack.c.l.b16 %v216
    %v554 = vunpack.c.h.b16 %v216
    %v555 = vunpack.c.l.b16 %v217
    %v556 = vunpack.c.h.b16 %v217
    %v557 = vunpack.c.l.b16 %v218
    %v558 = vunpack.c.h.b16 %v218
    %v559 = vunpack.c.l.b16 %v219
    %v560 = vunpack.c.h.b16 %v219
    %v561 = vunpack.c.l.b16 %v220
    %v562 = vunpack.c.h.b16 %v220
    %v563 = vunpack.c.l.b16 %v221
    %v564 = vunpack.c.h.b16 %v221
    %v565 = vunpack.c.l.b16 %v222
    %v566 = vunpack.c.h.b16 %v222
    %v567 = vunpack.c.l.b16 %v223
    %v568 = vunpack.c.h.b16 %v223
    %v569 = vunpack.c.l.b16 %v224
    %v570 = vunpack.c.h.b16 %v224
    %v571 = vunpack.c.l.b16 %v225
    %v572 = vunpack.c.h.b16 %v225
    %v573 = vunpack.c.l.b16 %v226
    %v574 = vunpack.c.h.b16 %v226
    %v575 = vunpack.c.l.b16 %v227
    %v576 = vunpack.c.h.b16 %v227
    %v577 = vunpack.c.l.b16 %v228
    %v578 = vunpack.c.h.b16 %v228
    %v579 = vunpack.c.l.b16 %v229
    %v580 = vunpack.c.h.b16 %v229
    %v581 = vunpack.c.l.b16 %v230
    %v582 = vunpack.c.h.b16 %v230
    %v583 = vunpack.c.l.b16 %v231
    %v584 = vunpack.c.h.b16 %v231
    %v585 = vunpack.c.l.b16 %v232
    %v586 = vunpack.c.h.b16 %v232
    %v587 = vunpack.c.l.b16 %v233
    %v588 = vunpack.c.h.b16 %v233
    %v589 = vunpack.c.l.b16 %v234
    %v590 = vunpack.c.h.b16 %v234
    %v591 = vunpack.c.l.b16 %v235
    %v592 = vunpack.c.h.b16 %v235
    %v593 = vunpack.c.l.b16 %v236
    %v594 = vunpack.c.h.b16 %v236
    %v595 = vunpack.c.l.b16 %v237
    %v596 = vunpack.c.h.b16 %v237
    %v597 = vunpack.c.l.b16 %v238
    %v598 = vunpack.c.h.b16 %v238
    %v599 = vunpack.c.l.b16 %v239
    %v600 = vunpack.c.h.b16 %v239
    %v601 = vunpack.c.l.b16 %v240
    %v602 = vunpack.c.h.b16 %v240
    %v603 = vunpack.c.l.b16 %v241
    %v604 = vunpack.c.h.b16 %v241
    %v605 = vunpack.c.l.b16 %v242
    %v606 = vunpack.c.h.b16 %v242
    %v607 = vunpack.c.l.b16 %v243
    %v608 = vunpack.c.h.b16 %v243
    %v609 = vunpack.c.l.b16 %v244
    %v610 = vunpack.c.h.b16 %v244
    %v611 = vunpack.c.l.b16 %v245
    %v612 = vunpack.c.h.b16 %v245
    %v613 = vunpack.c.l.b16 %v246
    %v614 = vunpack.c.h.b16 %v246
    %v615 = vunpack.c.l.b16 %v247
    %v616 = vunpack.c.h.b16 %v247
    %v617 = vunpack.c.l.b16 %v248
    %v618 = vunpack.c.h.b16 %v248
    %v619 = vunpack.c.l.b16 %v249
    %v620 = vunpack.c.h.b16 %v249
    %v621 = vunpack.c.l.b16 %v250
    %v622 = vunpack.c.h.b16 %v250
    %v623 = vunpack.c.l.b16 %v251
    %v624 = vunpack.c.h.b16 %v251
    %v625 = vunpack.c.l.b16 %v252
    %v626 = vunpack.c.h.b16 %v252
    %v627 = vunpack.c.l.b16 %v253
    %v628 = vunpack.c.h.b16 %v253
    %v629 = vunpack.c.l.b16 %v254
    %v630 = vunpack.c.h.b16 %v254
    %v631 = vunpack.c.l.b16 %v255
    %v632 = vunpack.c.h.b16 %v255
    %v633 = vunpack.c.l.b16 %v256
    %v634 = vunpack.c.h.b16 %v256
    %v635 = vunpack.c.l.b16 %v257
    %v636 = vunpack.c.h.b16 %v257
    %v637 = vunpack.c.l.b16 %v258
    %v638 = vunpack.c.h.b16 %v258
    %v639 = vunpack.c.l.b16 %v259
    %v640 = vunpack.c.h.b16 %v259
    %v641 = vunpack.c.l.b16 %v260
    %v642 = vunpack.c.h.b16 %v260
    %v643 = vunpack.c.l.b16 %v261
    %v644 = vunpack.c.h.b16 %v261
    %v645 = vunpack.c.l.b16 %v262
    %v646 = vunpack.c.h.b16 %v262
    %v647 = vpack.c.b16 %v399, %v391
    %v648 = vpack.c.b16 %v400, %v392
    %v649 = vpack.c.b16 %v401, %v393
    %v650 = vpack.c.b16 %v402, %v394
    %v651 = vpack.c.b16 %v403, %v395
    %v652 = vpack.c.b16 %v404, %v396
    %v653 = vpack.c.b16 %v405, %v397
    %v654 = vpack.c.b16 %v406, %v398
    %v655 = vpack.c.b16 %v415, %v407
    %v656 = vpack.c.b16 %v416, %v408
    %v657 = vpack.c.b16 %v417, %v409
    %v658 = vpack.c.b16 %v418, %v410
    %v659 = vpack.c.b16 %v419, %v411
    %v660 = vpack.c.b16 %v420, %v412
    %v661 = vpack.c.b16 %v421, %v413
    %v662 = vpack.c.b16 %v422, %v414
    %v663 = vpack.c.b16 %v431, %v423
    %v664 = vpack.c.b16 %v432, %v424
    %v665 = vpack.c.b16 %v433, %v425
    %v666 = vpack.c.b16 %v434, %v426
    %v667 = vpack.c.b16 %v435, %v427
    %v668 = vpack.c.b16 %v436, %v428
    %v669 = vpack.c.b16 %v437, %v429
    %v670 = vpack.c.b16 %v438, %v430
    %v671 = vpack.c.b16 %v447, %v439
    %v672 = vpack.c.b16 %v448, %v440
    %v673 = vpack.c.b16 %v449, %v441
    %v674 = vpack.c.b16 %v450, %v442
    %v675 = vpack.c.b16 %v451, %v443
    %v676 = vpack.c.b16 %v452, %v444
    %v677 = vpack.c.b16 %v453, %v445
    %v678 = vpack.c.b16 %v454, %v446
    %v679 = vpack.c.b16 %v463, %v455
    %v680 = vpack.c.b16 %v464, %v456
    %v681 = vpack.c.b16 %v465, %v457
    %v682 = vpack.c.b16 %v466, %v458
    %v683 = vpack.c.b16 %v467, %v459
    %v684 = vpack.c.b16 %v468, %v460
    %v685 = vpack.c.b16 %v469, %v461
    %v686 = vpack.c.b16 %v470, %v462
    %v687 = vpack.c.b16 %v479, %v471
    %v688 = vpack.c.b16 %v480, %v472
    %v689 = vpack.c.b16 %v481, %v473
    %v690 = vpack.c.b16 %v482, %v474
    %v691 = vpack.c.b16 %v483, %v475
    %v692 = vpack.c.b16 %v484, %v476
    %v693 = vpack.c.b16 %v485, %v477
    %v694 = vpack.c.b16 %v486, %v478
    %v695 = vpack.c.b16 %v495, %v487
    %v696 = vpack.c.b16 %v496, %v488
    %v697 = vpack.c.b16 %v497, %v489
    %v698 = vpack.c.b16 %v498, %v490
    %v699 = vpack.c.b16 %v499, %v491
    %v700 = vpack.c.b16 %v500, %v492
    %v701 = vpack.c.b16 %v501, %v493
    %v702 = vpack.c.b16 %v502, %v494
    %v703 = vpack.c.b16 %v511, %v503
    %v704 = vpack.c.b16 %v512, %v504
    %v705 = vpack.c.b16 %v513, %v505
    %v706 = vpack.c.b16 %v514, %v506
    %v707 = vpack.c.b16 %v515, %v507
    %v708 = vpack.c.b16 %v516, %v508
    %v709 = vpack.c.b16 %v517, %v509
    %v710 = vpack.c.b16 %v518, %v510
    %v711 = vpack.c.b16 %v527, %v519
    %v712 = vpack.c.b16 %v528, %v520
    %v713 = vpack.c.b16 %v529, %v521
    %v714 = vpack.c.b16 %v530, %v522
    %v715 = vpack.c.b16 %v531, %v523
    %v716 = vpack.c.b16 %v532, %v524
    %v717 = vpack.c.b16 %v533, %v525
    %v718 = vpack.c.b16 %v534, %v526
    %v719 = vpack.c.b16 %v543, %v535
    %v720 = vpack.c.b16 %v544, %v536
    %v721 = vpack.c.b16 %v545, %v537
    %v722 = vpack.c.b16 %v546, %v538
    %v723 = vpack.c.b16 %v547, %v539
    %v724 = vpack.c.b16 %v548, %v540
    %v725 = vpack.c.b16 %v549, %v541
    %v726 = vpack.c.b16 %v550, %v542
    %v727 = vpack.c.b16 %v559, %v551
    %v728 = vpack.c.b16 %v560, %v552
    %v729 = vpack.c.b16 %v561, %v553
    %v730 = vpack.c.b16 %v562, %v554
    %v731 = vpack.c.b16 %v563, %v555
    %v732 = vpack.c.b16 %v564, %v556
    %v733 = vpack.c.b16 %v565, %v557
    %v734 = vpack.c.b16 %v566, %v558
    %v735 = vpack.c.b16 %v575, %v567
    %v736 = vpack.c.b16 %v576, %v568
    %v737 = vpack.c.b16 %v577, %v569
    %v738 = vpack.c.b16 %v578, %v570
    %v739 = vpack.c.b16 %v579, %v571
    %v740 = vpack.c.b16 %v580, %v572
    %v741 = vpack.c.b16 %v581, %v573
    %v742 = vpack.c.b16 %v582, %v574
    %v743 = vpack.c.b16 %v591, %v583
    %v744 = vpack.c.b16 %v592, %v584
    %v745 = vpack.c.b16 %v593, %v585
    %v746 = vpack.c.b16 %v594, %v586
    %v747 = vpack.c.b16 %v595, %v587
    %v748 = vpack.c.b16 %v596, %v588
    %v749 = vpack.c.b16 %v597, %v589
    %v750 = vpack.c.b16 %v598, %v590
    %v751 = vpack.c.b16 %v607, %v599
    %v752 = vpack.c.b16 %v608, %v600
    %v753 = vpack.c.b16 %v609, %v601
    %v754 = vpack.c.b16 %v610, %v602
    %v755 = vpack.c.b16 %v611, %v603
    %v756 = vpack.c.b16 %v612, %v604
    %v757 = vpack.c.b16 %v613, %v605
    %v758 = vpack.c.b16 %v614, %v606
    %v759 = vpack.c.b16 %v623, %v615
    %v760 = vpack.c.b16 %v624, %v616
    %v761 = vpack.c.b16 %v625, %v617
    %v762 = vpack.c.b16 %v626, %v618
    %v763 = vpack.c.b16 %v627, %v619
    %v764 = vpack.c.b16 %v628, %v620
    %v765 = vpack.c.b16 %v629, %v621
    %v766 = vpack.c.b16 %v630, %v622
    %v767 = vpack.c.b16 %v639, %v631
    %v768 = vpack.c.b16 %v640, %v632
    %v769 = vpack.c.b16 %v641, %v633
    %v770 = vpack.c.b16 %v642, %v634
    %v771 = vpack.c.b16 %v643, %v635
    %v772 = vpack.c.b16 %v644, %v636
    %v773 = vpack.c.b16 %v645, %v637
    %v774 = vpack.c.b16 %v646, %v638
    %903 = vmatprep.subr.bf16.mxu0 %v648
    %904 = vmatpush1.bf16.msra.mxu0 %v647
    %905 = vmatprep.subr.bf16.mxu0 %v656
    %906 = vmatpush1.bf16.msra.mxu0 %v655
    %907 = vmatprep.subr.bf16.mxu0 %v664
    %908 = vmatpush1.bf16.msra.mxu0 %v663
    %909 = vmatprep.subr.bf16.mxu0 %v672
    %910 = vmatpush1.bf16.msra.mxu0 %v671
    %911 = vmatprep.subr.bf16.mxu0 %v680
    %912 = vmatpush1.bf16.msra.mxu0 %v679
    %913 = vmatprep.subr.bf16.mxu0 %v688
    %914 = vmatpush1.bf16.msra.mxu0 %v687
    %915 = vmatprep.subr.bf16.mxu0 %v696
    %916 = vmatpush1.bf16.msra.mxu0 %v695
    %917 = vmatprep.subr.bf16.mxu0 %v704
    %918 = vmatpush1.bf16.msra.mxu0 %v703
    %919 = vmatprep.subr.bf16.mxu0 %v712
    %920 = vmatpush1.bf16.msra.mxu0 %v711
    %921 = vmatprep.subr.bf16.mxu0 %v720
    %922 = vmatpush1.bf16.msra.mxu0 %v719
    %923 = vmatprep.subr.bf16.mxu0 %v728
    %924 = vmatpush1.bf16.msra.mxu0 %v727
    %925 = vmatprep.subr.bf16.mxu0 %v736
    %926 = vmatpush1.bf16.msra.mxu0 %v735
    %927 = vmatprep.subr.bf16.mxu0 %v744
    %928 = vmatpush1.bf16.msra.mxu0 %v743
    %929 = vmatprep.subr.bf16.mxu0 %v752
    %930 = vmatpush1.bf16.msra.mxu0 %v751
    %931 = vmatprep.subr.bf16.mxu0 %v760
    %932 = vmatpush1.bf16.msra.mxu0 %v759
    %933 = vmatprep.subr.bf16.mxu0 %v768
    %934 = vmatpush1.bf16.msra.mxu0 %v767
    %935 = vmatprep.mubr.bf16.mxu0 %v134
    %936 = vmatmul.mubr.bf16.gmra.mrb[0].mxu0 %v133
    %v937 = vpop.f32.mrb[0].mxu0
    %v938 = vadd.f32 0.0, %v937
    %v939 = vpop.f32.mrb[0].mxu0
    %v940 = vadd.f32 0.0, %v939
    %v941 = vpop.f32.mrb[0].mxu0
    %v942 = vpop.f32.mrb[0].mxu0
    %943 = vdwg.mxu0
    %944 = vmatprep.subr.bf16.mxu0 %v650
    %945 = vmatpush1.bf16.msra.mxu0 %v649
    %946 = vmatprep.subr.bf16.mxu0 %v658
    %947 = vmatpush1.bf16.msra.mxu0 %v657
    %948 = vmatprep.subr.bf16.mxu0 %v666
    %949 = vmatpush1.bf16.msra.mxu0 %v665
    %950 = vmatprep.subr.bf16.mxu0 %v674
    %951 = vmatpush1.bf16.msra.mxu0 %v673
    %952 = vmatprep.subr.bf16.mxu0 %v682
    %953 = vmatpush1.bf16.msra.mxu0 %v681
    %954 = vmatprep.subr.bf16.mxu0 %v690
    %955 = vmatpush1.bf16.msra.mxu0 %v689
    %956 = vmatprep.subr.bf16.mxu0 %v698
    %957 = vmatpush1.bf16.msra.mxu0 %v697
    %958 = vmatprep.subr.bf16.mxu0 %v706
    %959 = vmatpush1.bf16.msra.mxu0 %v705
    %960 = vmatprep.subr.bf16.mxu0 %v714
    %961 = vmatpush1.bf16.msra.mxu0 %v713
    %962 = vmatprep.subr.bf16.mxu0 %v722
    %963 = vmatpush1.bf16.msra.mxu0 %v721
    %964 = vmatprep.subr.bf16.mxu0 %v730
    %965 = vmatpush1.bf16.msra.mxu0 %v729
    %966 = vmatprep.subr.bf16.mxu0 %v738
    %967 = vmatpush1.bf16.msra.mxu0 %v737
    %968 = vmatprep.subr.bf16.mxu0 %v746
    %969 = vmatpush1.bf16.msra.mxu0 %v745
    %970 = vmatprep.subr.bf16.mxu0 %v754
    %971 = vmatpush1.bf16.msra.mxu0 %v753
    %972 = vmatprep.subr.bf16.mxu0 %v762
    %973 = vmatpush1.bf16.msra.mxu0 %v761
    %974 = vmatprep.subr.bf16.mxu0 %v770
    %975 = vmatpush1.bf16.msra.mxu0 %v769
    %976 = vmatprep.mubr.bf16.mxu0 %v134
    %977 = vmatmul.mubr.bf16.gmra.mrb[0].mxu0 %v133
    %v978 = vpop.f32.mrb[0].mxu0
    %v979 = vadd.f32 0.0, %v978
    %v980 = vpop.f32.mrb[0].mxu0
    %v981 = vadd.f32 0.0, %v980
    %v982 = vpop.f32.mrb[0].mxu0
    %v983 = vpop.f32.mrb[0].mxu0
    %984 = vdwg.mxu0
    %985 = vmatprep.subr.bf16.mxu0 %v652
    %986 = vmatpush1.bf16.msra.mxu0 %v651
    %987 = vmatprep.subr.bf16.mxu0 %v660
    %988 = vmatpush1.bf16.msra.mxu0 %v659
    %989 = vmatprep.subr.bf16.mxu0 %v668
    %990 = vmatpush1.bf16.msra.mxu0 %v667
    %991 = vmatprep.subr.bf16.mxu0 %v676
    %992 = vmatpush1.bf16.msra.mxu0 %v675
    %993 = vmatprep.subr.bf16.mxu0 %v684
    %994 = vmatpush1.bf16.msra.mxu0 %v683
    %995 = vmatprep.subr.bf16.mxu0 %v692
    %996 = vmatpush1.bf16.msra.mxu0 %v691
    %997 = vmatprep.subr.bf16.mxu0 %v700
    %998 = vmatpush1.bf16.msra.mxu0 %v699
    %999 = vmatprep.subr.bf16.mxu0 %v708
    %1000 = vmatpush1.bf16.msra.mxu0 %v707
    %1001 = vmatprep.subr.bf16.mxu0 %v716
    %1002 = vmatpush1.bf16.msra.mxu0 %v715
    %1003 = vmatprep.subr.bf16.mxu0 %v724
    %1004 = vmatpush1.bf16.msra.mxu0 %v723
    %1005 = vmatprep.subr.bf16.mxu0 %v732
    %1006 = vmatpush1.bf16.msra.mxu0 %v731
    %1007 = vmatprep.subr.bf16.mxu0 %v740
    %1008 = vmatpush1.bf16.msra.mxu0 %v739
    %1009 = vmatprep.subr.bf16.mxu0 %v748
    %1010 = vmatpush1.bf16.msra.mxu0 %v747
    %1011 = vmatprep.subr.bf16.mxu0 %v756
    %1012 = vmatpush1.bf16.msra.mxu0 %v755
    %1013 = vmatprep.subr.bf16.mxu0 %v764
    %1014 = vmatpush1.bf16.msra.mxu0 %v763
    %1015 = vmatprep.subr.bf16.mxu0 %v772
    %1016 = vmatpush1.bf16.msra.mxu0 %v771
    %1017 = vmatprep.mubr.bf16.mxu0 %v134
    %1018 = vmatmul.mubr.bf16.gmra.mrb[0].mxu0 %v133
    %v1019 = vpop.f32.mrb[0].mxu0
    %v1020 = vadd.f32 0.0, %v1019
    %v1021 = vpop.f32.mrb[0].mxu0
    %v1022 = vadd.f32 0.0, %v1021
    %v1023 = vpop.f32.mrb[0].mxu0
    %v1024 = vpop.f32.mrb[0].mxu0
    %1025 = vdwg.mxu0
    %1026 = vmatprep.subr.bf16.mxu0 %v654
    %1027 = vmatpush1.bf16.msra.mxu0 %v653
    %1028 = vmatprep.subr.bf16.mxu0 %v662
    %1029 = vmatpush1.bf16.msra.mxu0 %v661
    %1030 = vmatprep.subr.bf16.mxu0 %v670
    %1031 = vmatpush1.bf16.msra.mxu0 %v669
    %1032 = vmatprep.subr.bf16.mxu0 %v678
    %1033 = vmatpush1.bf16.msra.mxu0 %v677
    %1034 = vmatprep.subr.bf16.mxu0 %v686
    %1035 = vmatpush1.bf16.msra.mxu0 %v685
    %1036 = vmatprep.subr.bf16.mxu0 %v694
    %1037 = vmatpush1.bf16.msra.mxu0 %v693
    %1038 = vmatprep.subr.bf16.mxu0 %v702
    %1039 = vmatpush1.bf16.msra.mxu0 %v701
    %1040 = vmatprep.subr.bf16.mxu0 %v710
    %1041 = vmatpush1.bf16.msra.mxu0 %v709
    %1042 = vmatprep.subr.bf16.mxu0 %v718
    %1043 = vmatpush1.bf16.msra.mxu0 %v717
    %1044 = vmatprep.subr.bf16.mxu0 %v726
    %1045 = vmatpush1.bf16.msra.mxu0 %v725
    %1046 = vmatprep.subr.bf16.mxu0 %v734
    %1047 = vmatpush1.bf16.msra.mxu0 %v733
    %1048 = vmatprep.subr.bf16.mxu0 %v742
    %1049 = vmatpush1.bf16.msra.mxu0 %v741
    %1050 = vmatprep.subr.bf16.mxu0 %v750
    %1051 = vmatpush1.bf16.msra.mxu0 %v749
    %1052 = vmatprep.subr.bf16.mxu0 %v758
    %1053 = vmatpush1.bf16.msra.mxu0 %v757
    %1054 = vmatprep.subr.bf16.mxu0 %v766
    %1055 = vmatpush1.bf16.msra.mxu0 %v765
    %1056 = vmatprep.subr.bf16.mxu0 %v774
    %1057 = vmatpush1.bf16.msra.mxu0 %v773
    %1058 = vmatprep.mubr.bf16.mxu0 %v134
    %1059 = vmatmul.mubr.bf16.gmra.mrb[0].mxu0 %v133
    %v1060 = vpop.f32.mrb[0].mxu0
    %v1061 = vadd.f32 0.0, %v1060
    %v1062 = vpop.f32.mrb[0].mxu0
    %v1063 = vadd.f32 0.0, %v1062
    %v1064 = vpop.f32.mrb[0].mxu0
    %v1065 = vpop.f32.mrb[0].mxu0
    %1066 = vdwg.mxu0
    %v1068 = vlaneseq
    %v1069 = vshrl.u32 %v1068, 7
    %v1070 = vsub.s32 0, %v1069
    %v1071 = vrot.slane %v120, %v1070
    %v1072 = vlaneseq
    %v1073 = vshrl.u32 %v1072, 7
    %v1074 = vsub.s32 2, %v1073
    %v1075 = vrot.slane %v120, %v1074
    %v1078 = vlaneseq
    %v1079 = vshrl.u32 %v1078, 7
    %v1080 = vsub.s32 0, %v1079
    %v1081 = vrot.slane %v1071, %v1080
    %v1082 = vlaneseq
    %v1083 = vshrl.u32 %v1082, 7
    %v1084 = vsub.s32 0, %v1083
    %v1085 = vrot.slane %v1075, %v1084
    %v1086 = vmul.f32 %v938, %v1081
    %v1087 = vmul.f32 %v940, %v1085
    %v1089 = vlaneseq
    %v1090 = vshrl.u32 %v1089, 7
    %v1091 = vsub.s32 0, %v1090
    %v1092 = vrot.slane %v121, %v1091
    %v1093 = vlaneseq
    %v1094 = vshrl.u32 %v1093, 7
    %v1095 = vsub.s32 2, %v1094
    %v1096 = vrot.slane %v121, %v1095
    %v1099 = vlaneseq
    %v1100 = vshrl.u32 %v1099, 7
    %v1101 = vsub.s32 0, %v1100
    %v1102 = vrot.slane %v1092, %v1101
    %v1103 = vlaneseq
    %v1104 = vshrl.u32 %v1103, 7
    %v1105 = vsub.s32 0, %v1104
    %v1106 = vrot.slane %v1096, %v1105
    %v1107 = vmul.f32 %v979, %v1102
    %v1108 = vmul.f32 %v981, %v1106
    %v1109 = vsub.f32 %v1086, %v1107
    %v1110 = vsub.f32 %v1087, %v1108
    %v1111 = vmul.f32 %v938, %v1102
    %v1112 = vmul.f32 %v940, %v1106
    %v1113 = vmul.f32 %v979, %v1081
    %v1114 = vmul.f32 %v981, %v1085
    %v1115 = vadd.f32 %v1111, %v1113
    %v1116 = vadd.f32 %v1112, %v1114
    %v1119 = vrot.slane %v1115, 6
    %v1120 = vrot.slane %v1116, 6
    %vm1123 = vcmask 1041408
    %v1124 = vsel %vm1123, %v1109, %v1119
    %v1125 = vsel %vm1123, %v1110, %v1120
    %v1126 = vpack.c.bf16 %v1124, %v1124
    %v1127 = vpack.c.bf16 %v1125, %v1125
    %v1128 = vld [vmem:[#allocation8] sm:$0xff]
    %v1129 = vld [vmem:[#allocation8 + $0x8] sm:$0xff]
    %v1130 = vld [vmem:[#allocation8 + $0x10] sm:$0xff]
    %v1131 = vld [vmem:[#allocation8 + $0x18] sm:$0xff]
    %v1132 = vld [vmem:[#allocation8 + $0x20] sm:$0xff]
    %v1133 = vld [vmem:[#allocation8 + $0x28] sm:$0xff]
    %v1134 = vld [vmem:[#allocation8 + $0x30] sm:$0xff]
    %v1135 = vld [vmem:[#allocation8 + $0x38] sm:$0xff]
    %v1136 = vld [vmem:[#allocation8 + $0x40] sm:$0xff]
    %v1137 = vld [vmem:[#allocation8 + $0x48] sm:$0xff]
    %v1138 = vld [vmem:[#allocation8 + $0x50] sm:$0xff]
    %v1139 = vld [vmem:[#allocation8 + $0x58] sm:$0xff]
    %v1140 = vld [vmem:[#allocation8 + $0x60] sm:$0xff]
    %v1141 = vld [vmem:[#allocation8 + $0x68] sm:$0xff]
    %v1142 = vld [vmem:[#allocation8 + $0x70] sm:$0xff]
    %v1143 = vld [vmem:[#allocation8 + $0x78] sm:$0xff]
    %v1144 = vld [vmem:[#allocation8 + $0x80] sm:$0xff]
    %v1145 = vld [vmem:[#allocation8 + $0x88] sm:$0xff]
    %v1146 = vld [vmem:[#allocation8 + $0x90] sm:$0xff]
    %v1147 = vld [vmem:[#allocation8 + $0x98] sm:$0xff]
    %v1148 = vld [vmem:[#allocation8 + $0xa0] sm:$0xff]
    %v1149 = vld [vmem:[#allocation8 + $0xa8] sm:$0xff]
    %v1150 = vld [vmem:[#allocation8 + $0xb0] sm:$0xff]
    %v1151 = vld [vmem:[#allocation8 + $0xb8] sm:$0xff]
    %v1152 = vld [vmem:[#allocation8 + $0xc0] sm:$0xff]
    %v1153 = vld [vmem:[#allocation8 + $0xc8] sm:$0xff]
    %v1154 = vld [vmem:[#allocation8 + $0xd0] sm:$0xff]
    %v1155 = vld [vmem:[#allocation8 + $0xd8] sm:$0xff]
    %v1156 = vld [vmem:[#allocation8 + $0xe0] sm:$0xff]
    %v1157 = vld [vmem:[#allocation8 + $0xe8] sm:$0xff]
    %v1158 = vld [vmem:[#allocation8 + $0xf0] sm:$0xff]
    %v1159 = vld [vmem:[#allocation8 + $0xf8] sm:$0xff]
    %v1192 = vunpack.c.l.b16 %v1128
    %v1193 = vunpack.c.h.b16 %v1128
    %v1194 = vunpack.c.l.b16 %v1129
    %v1195 = vunpack.c.h.b16 %v1129
    %v1196 = vunpack.c.l.b16 %v1130
    %v1197 = vunpack.c.h.b16 %v1130
    %v1198 = vunpack.c.l.b16 %v1131
    %v1199 = vunpack.c.h.b16 %v1131
    %v1200 = vunpack.c.l.b16 %v1132
    %v1201 = vunpack.c.h.b16 %v1132
    %v1202 = vunpack.c.l.b16 %v1133
    %v1203 = vunpack.c.h.b16 %v1133
    %v1204 = vunpack.c.l.b16 %v1134
    %v1205 = vunpack.c.h.b16 %v1134
    %v1206 = vunpack.c.l.b16 %v1135
    %v1207 = vunpack.c.h.b16 %v1135
    %v1208 = vunpack.c.l.b16 %v1136
    %v1209 = vunpack.c.h.b16 %v1136
    %v1210 = vunpack.c.l.b16 %v1137
    %v1211 = vunpack.c.h.b16 %v1137
    %v1212 = vunpack.c.l.b16 %v1138
    %v1213 = vunpack.c.h.b16 %v1138
    %v1214 = vunpack.c.l.b16 %v1139
    %v1215 = vunpack.c.h.b16 %v1139
    %v1216 = vunpack.c.l.b16 %v1140
    %v1217 = vunpack.c.h.b16 %v1140
    %v1218 = vunpack.c.l.b16 %v1141
    %v1219 = vunpack.c.h.b16 %v1141
    %v1220 = vunpack.c.l.b16 %v1142
    %v1221 = vunpack.c.h.b16 %v1142
    %v1222 = vunpack.c.l.b16 %v1143
    %v1223 = vunpack.c.h.b16 %v1143
    %v1224 = vunpack.c.l.b16 %v1144
    %v1225 = vunpack.c.h.b16 %v1144
    %v1226 = vunpack.c.l.b16 %v1145
    %v1227 = vunpack.c.h.b16 %v1145
    %v1228 = vunpack.c.l.b16 %v1146
    %v1229 = vunpack.c.h.b16 %v1146
    %v1230 = vunpack.c.l.b16 %v1147
    %v1231 = vunpack.c.h.b16 %v1147
    %v1232 = vunpack.c.l.b16 %v1148
    %v1233 = vunpack.c.h.b16 %v1148
    %v1234 = vunpack.c.l.b16 %v1149
    %v1235 = vunpack.c.h.b16 %v1149
    %v1236 = vunpack.c.l.b16 %v1150
    %v1237 = vunpack.c.h.b16 %v1150
    %v1238 = vunpack.c.l.b16 %v1151
    %v1239 = vunpack.c.h.b16 %v1151
    %v1240 = vunpack.c.l.b16 %v1152
    %v1241 = vunpack.c.h.b16 %v1152
    %v1242 = vunpack.c.l.b16 %v1153
    %v1243 = vunpack.c.h.b16 %v1153
    %v1244 = vunpack.c.l.b16 %v1154
    %v1245 = vunpack.c.h.b16 %v1154
    %v1246 = vunpack.c.l.b16 %v1155
    %v1247 = vunpack.c.h.b16 %v1155
    %v1248 = vunpack.c.l.b16 %v1156
    %v1249 = vunpack.c.h.b16 %v1156
    %v1250 = vunpack.c.l.b16 %v1157
    %v1251 = vunpack.c.h.b16 %v1157
    %v1252 = vunpack.c.l.b16 %v1158
    %v1253 = vunpack.c.h.b16 %v1158
    %v1254 = vunpack.c.l.b16 %v1159
    %v1255 = vunpack.c.h.b16 %v1159
    %v1256 = vpack.c.b16 %v1194, %v1192
    %v1257 = vpack.c.b16 %v1195, %v1193
    %v1258 = vpack.c.b16 %v1198, %v1196
    %v1259 = vpack.c.b16 %v1199, %v1197
    %v1260 = vpack.c.b16 %v1202, %v1200
    %v1261 = vpack.c.b16 %v1203, %v1201
    %v1262 = vpack.c.b16 %v1206, %v1204
    %v1263 = vpack.c.b16 %v1207, %v1205
    %v1264 = vpack.c.b16 %v1210, %v1208
    %v1265 = vpack.c.b16 %v1211, %v1209
    %v1266 = vpack.c.b16 %v1214, %v1212
    %v1267 = vpack.c.b16 %v1215, %v1213
    %v1268 = vpack.c.b16 %v1218, %v1216
    %v1269 = vpack.c.b16 %v1219, %v1217
    %v1270 = vpack.c.b16 %v1222, %v1220
    %v1271 = vpack.c.b16 %v1223, %v1221
    %v1272 = vpack.c.b16 %v1226, %v1224
    %v1273 = vpack.c.b16 %v1227, %v1225
    %v1274 = vpack.c.b16 %v1230, %v1228
    %v1275 = vpack.c.b16 %v1231, %v1229
    %v1276 = vpack.c.b16 %v1234, %v1232
    %v1277 = vpack.c.b16 %v1235, %v1233
    %v1278 = vpack.c.b16 %v1238, %v1236
    %v1279 = vpack.c.b16 %v1239, %v1237
    %v1280 = vpack.c.b16 %v1242, %v1240
    %v1281 = vpack.c.b16 %v1243, %v1241
    %v1282 = vpack.c.b16 %v1246, %v1244
    %v1283 = vpack.c.b16 %v1247, %v1245
    %v1284 = vpack.c.b16 %v1250, %v1248
    %v1285 = vpack.c.b16 %v1251, %v1249
    %v1286 = vpack.c.b16 %v1254, %v1252
    %v1287 = vpack.c.b16 %v1255, %v1253
    %1320 = vmatprep.subr.bf16.mxu0 %v1257
    %1321 = vmatpush1.bf16.msra.mxu0 %v1256
    %1322 = vmatprep.subr.bf16.mxu0 %v1259
    %1323 = vmatpush1.bf16.msra.mxu0 %v1258
    %1324 = vmatprep.subr.bf16.mxu0 %v1261
    %1325 = vmatpush1.bf16.msra.mxu0 %v1260
    %1326 = vmatprep.subr.bf16.mxu0 %v1263
    %1327 = vmatpush1.bf16.msra.mxu0 %v1262
    %1328 = vmatprep.subr.bf16.mxu0 %v1265
    %1329 = vmatpush1.bf16.msra.mxu0 %v1264
    %1330 = vmatprep.subr.bf16.mxu0 %v1267
    %1331 = vmatpush1.bf16.msra.mxu0 %v1266
    %1332 = vmatprep.subr.bf16.mxu0 %v1269
    %1333 = vmatpush1.bf16.msra.mxu0 %v1268
    %1334 = vmatprep.subr.bf16.mxu0 %v1271
    %1335 = vmatpush1.bf16.msra.mxu0 %v1270
    %1336 = vmatprep.subr.bf16.mxu0 %v1273
    %1337 = vmatpush1.bf16.msra.mxu0 %v1272
    %1338 = vmatprep.subr.bf16.mxu0 %v1275
    %1339 = vmatpush1.bf16.msra.mxu0 %v1274
    %1340 = vmatprep.subr.bf16.mxu0 %v1277
    %1341 = vmatpush1.bf16.msra.mxu0 %v1276
    %1342 = vmatprep.subr.bf16.mxu0 %v1279
    %1343 = vmatpush1.bf16.msra.mxu0 %v1278
    %1344 = vmatprep.subr.bf16.mxu0 %v1281
    %1345 = vmatpush1.bf16.msra.mxu0 %v1280
    %1346 = vmatprep.subr.bf16.mxu0 %v1283
    %1347 = vmatpush1.bf16.msra.mxu0 %v1282
    %1348 = vmatprep.subr.bf16.mxu0 %v1285
    %1349 = vmatpush1.bf16.msra.mxu0 %v1284
    %1350 = vmatprep.subr.bf16.mxu0 %v1287
    %1351 = vmatpush1.bf16.msra.mxu0 %v1286
    %1352 = vmatprep.mubr.bf16.mxu0 %v1127
    %1353 = vmatmul.mubr.bf16.gmra.mrb[0].mxu0 %v1126
    %v1354 = vpop.f32.mrb[0].mxu0
    %v1355 = vadd.f32 0.0, %v1354
    %v1356 = vpop.f32.mrb[0].mxu0
    %v1357 = vadd.f32 0.0, %v1356
    %v1358 = vpop.f32.mrb[0].mxu0
    %v1359 = vpop.f32.mrb[0].mxu0
    %1360 = vdwg.mxu0
    %v1361 = vld [vmem:[#allocation9] sm:$0xff]
    %v1362 = vld [vmem:[#allocation9 + $0x8] sm:$0xff]
    %v1363 = vld [vmem:[#allocation9 + $0x10] sm:$0xff]
    %v1364 = vld [vmem:[#allocation9 + $0x18] sm:$0xff]
    %v1365 = vld [vmem:[#allocation9 + $0x20] sm:$0xff]
    %v1366 = vld [vmem:[#allocation9 + $0x28] sm:$0xff]
    %v1367 = vld [vmem:[#allocation9 + $0x30] sm:$0xff]
    %v1368 = vld [vmem:[#allocation9 + $0x38] sm:$0xff]
    %v1369 = vld [vmem:[#allocation9 + $0x40] sm:$0xff]
    %v1370 = vld [vmem:[#allocation9 + $0x48] sm:$0xff]
    %v1371 = vld [vmem:[#allocation9 + $0x50] sm:$0xff]
    %v1372 = vld [vmem:[#allocation9 + $0x58] sm:$0xff]
    %v1373 = vld [vmem:[#allocation9 + $0x60] sm:$0xff]
    %v1374 = vld [vmem:[#allocation9 + $0x68] sm:$0xff]
    %v1375 = vld [vmem:[#allocation9 + $0x70] sm:$0xff]
    %v1376 = vld [vmem:[#allocation9 + $0x78] sm:$0xff]
    %v1377 = vld [vmem:[#allocation9 + $0x80] sm:$0xff]
    %v1378 = vld [vmem:[#allocation9 + $0x88] sm:$0xff]
    %v1379 = vld [vmem:[#allocation9 + $0x90] sm:$0xff]
    %v1380 = vld [vmem:[#allocation9 + $0x98] sm:$0xff]
    %v1381 = vld [vmem:[#allocation9 + $0xa0] sm:$0xff]
    %v1382 = vld [vmem:[#allocation9 + $0xa8] sm:$0xff]
    %v1383 = vld [vmem:[#allocation9 + $0xb0] sm:$0xff]
    %v1384 = vld [vmem:[#allocation9 + $0xb8] sm:$0xff]
    %v1385 = vld [vmem:[#allocation9 + $0xc0] sm:$0xff]
    %v1386 = vld [vmem:[#allocation9 + $0xc8] sm:$0xff]
    %v1387 = vld [vmem:[#allocation9 + $0xd0] sm:$0xff]
    %v1388 = vld [vmem:[#allocation9 + $0xd8] sm:$0xff]
    %v1389 = vld [vmem:[#allocation9 + $0xe0] sm:$0xff]
    %v1390 = vld [vmem:[#allocation9 + $0xe8] sm:$0xff]
    %v1391 = vld [vmem:[#allocation9 + $0xf0] sm:$0xff]
    %v1392 = vld [vmem:[#allocation9 + $0xf8] sm:$0xff]
    %v1425 = vunpack.c.l.b16 %v1361
    %v1426 = vunpack.c.h.b16 %v1361
    %v1427 = vunpack.c.l.b16 %v1362
    %v1428 = vunpack.c.h.b16 %v1362
    %v1429 = vunpack.c.l.b16 %v1363
    %v1430 = vunpack.c.h.b16 %v1363
    %v1431 = vunpack.c.l.b16 %v1364
    %v1432 = vunpack.c.h.b16 %v1364
    %v1433 = vunpack.c.l.b16 %v1365
    %v1434 = vunpack.c.h.b16 %v1365
    %v1435 = vunpack.c.l.b16 %v1366
    %v1436 = vunpack.c.h.b16 %v1366
    %v1437 = vunpack.c.l.b16 %v1367
    %v1438 = vunpack.c.h.b16 %v1367
    %v1439 = vunpack.c.l.b16 %v1368
    %v1440 = vunpack.c.h.b16 %v1368
    %v1441 = vunpack.c.l.b16 %v1369
    %v1442 = vunpack.c.h.b16 %v1369
    %v1443 = vunpack.c.l.b16 %v1370
    %v1444 = vunpack.c.h.b16 %v1370
    %v1445 = vunpack.c.l.b16 %v1371
    %v1446 = vunpack.c.h.b16 %v1371
    %v1447 = vunpack.c.l.b16 %v1372
    %v1448 = vunpack.c.h.b16 %v1372
    %v1449 = vunpack.c.l.b16 %v1373
    %v1450 = vunpack.c.h.b16 %v1373
    %v1451 = vunpack.c.l.b16 %v1374
    %v1452 = vunpack.c.h.b16 %v1374
    %v1453 = vunpack.c.l.b16 %v1375
    %v1454 = vunpack.c.h.b16 %v1375
    %v1455 = vunpack.c.l.b16 %v1376
    %v1456 = vunpack.c.h.b16 %v1376
    %v1457 = vunpack.c.l.b16 %v1377
    %v1458 = vunpack.c.h.b16 %v1377
    %v1459 = vunpack.c.l.b16 %v1378
    %v1460 = vunpack.c.h.b16 %v1378
    %v1461 = vunpack.c.l.b16 %v1379
    %v1462 = vunpack.c.h.b16 %v1379
    %v1463 = vunpack.c.l.b16 %v1380
    %v1464 = vunpack.c.h.b16 %v1380
    %v1465 = vunpack.c.l.b16 %v1381
    %v1466 = vunpack.c.h.b16 %v1381
    %v1467 = vunpack.c.l.b16 %v1382
    %v1468 = vunpack.c.h.b16 %v1382
    %v1469 = vunpack.c.l.b16 %v1383
    %v1470 = vunpack.c.h.b16 %v1383
    %v1471 = vunpack.c.l.b16 %v1384
    %v1472 = vunpack.c.h.b16 %v1384
    %v1473 = vunpack.c.l.b16 %v1385
    %v1474 = vunpack.c.h.b16 %v1385
    %v1475 = vunpack.c.l.b16 %v1386
    %v1476 = vunpack.c.h.b16 %v1386
    %v1477 = vunpack.c.l.b16 %v1387
    %v1478 = vunpack.c.h.b16 %v1387
    %v1479 = vunpack.c.l.b16 %v1388
    %v1480 = vunpack.c.h.b16 %v1388
    %v1481 = vunpack.c.l.b16 %v1389
    %v1482 = vunpack.c.h.b16 %v1389
    %v1483 = vunpack.c.l.b16 %v1390
    %v1484 = vunpack.c.h.b16 %v1390
    %v1485 = vunpack.c.l.b16 %v1391
    %v1486 = vunpack.c.h.b16 %v1391
    %v1487 = vunpack.c.l.b16 %v1392
    %v1488 = vunpack.c.h.b16 %v1392
    %v1489 = vpack.c.b16 %v1427, %v1425
    %v1490 = vpack.c.b16 %v1428, %v1426
    %v1491 = vpack.c.b16 %v1431, %v1429
    %v1492 = vpack.c.b16 %v1432, %v1430
    %v1493 = vpack.c.b16 %v1435, %v1433
    %v1494 = vpack.c.b16 %v1436, %v1434
    %v1495 = vpack.c.b16 %v1439, %v1437
    %v1496 = vpack.c.b16 %v1440, %v1438
    %v1497 = vpack.c.b16 %v1443, %v1441
    %v1498 = vpack.c.b16 %v1444, %v1442
    %v1499 = vpack.c.b16 %v1447, %v1445
    %v1500 = vpack.c.b16 %v1448, %v1446
    %v1501 = vpack.c.b16 %v1451, %v1449
    %v1502 = vpack.c.b16 %v1452, %v1450
    %v1503 = vpack.c.b16 %v1455, %v1453
    %v1504 = vpack.c.b16 %v1456, %v1454
    %v1505 = vpack.c.b16 %v1459, %v1457
    %v1506 = vpack.c.b16 %v1460, %v1458
    %v1507 = vpack.c.b16 %v1463, %v1461
    %v1508 = vpack.c.b16 %v1464, %v1462
    %v1509 = vpack.c.b16 %v1467, %v1465
    %v1510 = vpack.c.b16 %v1468, %v1466
    %v1511 = vpack.c.b16 %v1471, %v1469
    %v1512 = vpack.c.b16 %v1472, %v1470
    %v1513 = vpack.c.b16 %v1475, %v1473
    %v1514 = vpack.c.b16 %v1476, %v1474
    %v1515 = vpack.c.b16 %v1479, %v1477
    %v1516 = vpack.c.b16 %v1480, %v1478
    %v1517 = vpack.c.b16 %v1483, %v1481
    %v1518 = vpack.c.b16 %v1484, %v1482
    %v1519 = vpack.c.b16 %v1487, %v1485
    %v1520 = vpack.c.b16 %v1488, %v1486
    %1553 = vmatprep.subr.bf16.mxu0 %v1490
    %1554 = vmatpush1.bf16.msra.mxu0 %v1489
    %1555 = vmatprep.subr.bf16.mxu0 %v1492
    %1556 = vmatpush1.bf16.msra.mxu0 %v1491
    %1557 = vmatprep.subr.bf16.mxu0 %v1494
    %1558 = vmatpush1.bf16.msra.mxu0 %v1493
    %1559 = vmatprep.subr.bf16.mxu0 %v1496
    %1560 = vmatpush1.bf16.msra.mxu0 %v1495
    %1561 = vmatprep.subr.bf16.mxu0 %v1498
    %1562 = vmatpush1.bf16.msra.mxu0 %v1497
    %1563 = vmatprep.subr.bf16.mxu0 %v1500
    %1564 = vmatpush1.bf16.msra.mxu0 %v1499
    %1565 = vmatprep.subr.bf16.mxu0 %v1502
    %1566 = vmatpush1.bf16.msra.mxu0 %v1501
    %1567 = vmatprep.subr.bf16.mxu0 %v1504
    %1568 = vmatpush1.bf16.msra.mxu0 %v1503
    %1569 = vmatprep.subr.bf16.mxu0 %v1506
    %1570 = vmatpush1.bf16.msra.mxu0 %v1505
    %1571 = vmatprep.subr.bf16.mxu0 %v1508
    %1572 = vmatpush1.bf16.msra.mxu0 %v1507
    %1573 = vmatprep.subr.bf16.mxu0 %v1510
    %1574 = vmatpush1.bf16.msra.mxu0 %v1509
    %1575 = vmatprep.subr.bf16.mxu0 %v1512
    %1576 = vmatpush1.bf16.msra.mxu0 %v1511
    %1577 = vmatprep.subr.bf16.mxu0 %v1514
    %1578 = vmatpush1.bf16.msra.mxu0 %v1513
    %1579 = vmatprep.subr.bf16.mxu0 %v1516
    %1580 = vmatpush1.bf16.msra.mxu0 %v1515
    %1581 = vmatprep.subr.bf16.mxu0 %v1518
    %1582 = vmatpush1.bf16.msra.mxu0 %v1517
    %1583 = vmatprep.subr.bf16.mxu0 %v1520
    %1584 = vmatpush1.bf16.msra.mxu0 %v1519
    %1585 = vmatprep.mubr.bf16.mxu0 %v1127
    %1586 = vmatmul.mubr.bf16.gmra.mrb[0].mxu0 %v1126
    %v1587 = vpop.f32.mrb[0].mxu0
    %v1588 = vadd.f32 0.0, %v1587
    %v1589 = vpop.f32.mrb[0].mxu0
    %v1590 = vadd.f32 0.0, %v1589
    %v1591 = vpop.f32.mrb[0].mxu0
    %v1592 = vpop.f32.mrb[0].mxu0
    %1593 = vdwg.mxu0
    %v1596 = vrot.slane %v1588, 2
    %v1597 = vrot.slane %v1590, 2
    %v1600 = vsub.f32 %v1355, %v1596
    %v1601 = vsub.f32 %v1357, %v1597
    %v1604 = vrot.slane %v1355, 2
    %v1605 = vrot.slane %v1357, 2
    %v1608 = vadd.f32 %v1588, %v1604
    %v1609 = vadd.f32 %v1590, %v1605
    %v1610 = vlaneseq
    %v1611 = vshrl.u32 %v1610, 7
    %v1612 = vsub.s32 1, %v1611
    %v1613 = vrot.slane %v120, %v1612
    %v1614 = vlaneseq
    %v1615 = vshrl.u32 %v1614, 7
    %v1616 = vsub.s32 3, %v1615
    %v1617 = vrot.slane %v120, %v1616
    %v1620 = vlaneseq
    %v1621 = vshrl.u32 %v1620, 7
    %v1622 = vsub.s32 1, %v1621
    %v1623 = vrot.slane %v1613, %v1622
    %v1624 = vlaneseq
    %v1625 = vshrl.u32 %v1624, 7
    %v1626 = vsub.s32 1, %v1625
    %v1627 = vrot.slane %v1617, %v1626
    %v1628 = vmul.f32 %v1600, %v1623
    %v1629 = vmul.f32 %v1601, %v1627
    %v1630 = vlaneseq
    %v1631 = vshrl.u32 %v1630, 7
    %v1632 = vsub.s32 1, %v1631
    %v1633 = vrot.slane %v121, %v1632
    %v1634 = vlaneseq
    %v1635 = vshrl.u32 %v1634, 7
    %v1636 = vsub.s32 3, %v1635
    %v1637 = vrot.slane %v121, %v1636
    %v1640 = vlaneseq
    %v1641 = vshrl.u32 %v1640, 7
    %v1642 = vsub.s32 1, %v1641
    %v1643 = vrot.slane %v1633, %v1642
    %v1644 = vlaneseq
    %v1645 = vshrl.u32 %v1644, 7
    %v1646 = vsub.s32 1, %v1645
    %v1647 = vrot.slane %v1637, %v1646
    %v1648 = vmul.f32 %v1608, %v1643
    %v1649 = vmul.f32 %v1609, %v1647
    %v1650 = vsub.f32 %v1628, %v1648
    %v1651 = vsub.f32 %v1629, %v1649
    %v1652 = vmul.f32 %v1600, %v1643
    %v1653 = vmul.f32 %v1601, %v1647
    %v1654 = vmul.f32 %v1608, %v1623
    %v1655 = vmul.f32 %v1609, %v1627
    %v1656 = vadd.f32 %v1652, %v1654
    %v1657 = vadd.f32 %v1653, %v1655
    %v1658 = vmul.f32 %v1650, %v1650
    %v1659 = vmul.f32 %v1651, %v1651
    %v1660 = vmul.f32 %v1656, %v1656
    %v1661 = vmul.f32 %v1657, %v1657
    %v1662 = vadd.f32 %v1658, %v1660
    %v1663 = vadd.f32 %v1659, %v1661
    %v1664 = vrsqrt.pop %v1662
    %v1665 = vmul.f32 %v1662, %v1664
    %vm1666 = vcmp.eq.f32.partialorder %v1662, inf
    %v1667 = vsel %vm1666, %v1662, %v1665
    %vm1668 = vcmp.eq.f32.partialorder %v1662, 0.0
    %v1669 = vand.u32 %v1662, 2147483648
    %v1670 = vsel %vm1668, %v1669, %v1667
    %v1671 = vrsqrt.pop %v1663
    %v1672 = vmul.f32 %v1663, %v1671
    %vm1673 = vcmp.eq.f32.partialorder %v1663, inf
    %v1674 = vsel %vm1673, %v1663, %v1672
    %vm1675 = vcmp.eq.f32.partialorder %v1663, 0.0
    %v1676 = vand.u32 %v1663, 2147483648
    %v1677 = vsel %vm1675, %v1676, %v1674
    %s1678 = sld [smem:[#allocation11]]
    %v1679 = vstv %s1678
    %v1680 = vmul.f32 %v1670, %v1679
    %v1681 = vmul.f32 %v1677, %v1679
    %v1682 = vadd.f32 %v1680, 0.0
    %v1683 = vadd.f32 %v1681, 0.0
    %v1684 = vmul.f32 %v1020, %v1081
    %v1685 = vmul.f32 %v1022, %v1085
    %v1686 = vmul.f32 %v1061, %v1102
    %v1687 = vmul.f32 %v1063, %v1106
    %v1688 = vsub.f32 %v1684, %v1686
    %v1689 = vsub.f32 %v1685, %v1687
    %v1690 = vmul.f32 %v1020, %v1102
    %v1691 = vmul.f32 %v1022, %v1106
    %v1692 = vmul.f32 %v1061, %v1081
    %v1693 = vmul.f32 %v1063, %v1085
    %v1694 = vadd.f32 %v1690, %v1692
    %v1695 = vadd.f32 %v1691, %v1693
    %v1698 = vrot.slane %v1694, 6
    %v1699 = vrot.slane %v1695, 6
    %v1702 = vsel %vm1123, %v1688, %v1698
    %v1703 = vsel %vm1123, %v1689, %v1699
    %v1704 = vpack.c.bf16 %v1702, %v1702
    %v1705 = vpack.c.bf16 %v1703, %v1703
    %s1706 = scalar_lea.vmem [#allocation8], 256
    %v1707 = vld [vmem:[%s1706] sm:$0xff]
    %v1708 = vld [vmem:[%s1706 + $0x8] sm:$0xff]
    %v1709 = vld [vmem:[%s1706 + $0x10] sm:$0xff]
    %v1710 = vld [vmem:[%s1706 + $0x18] sm:$0xff]
    %v1711 = vld [vmem:[%s1706 + $0x20] sm:$0xff]
    %v1712 = vld [vmem:[%s1706 + $0x28] sm:$0xff]
    %v1713 = vld [vmem:[%s1706 + $0x30] sm:$0xff]
    %v1714 = vld [vmem:[%s1706 + $0x38] sm:$0xff]
    %v1715 = vld [vmem:[%s1706 + $0x40] sm:$0xff]
    %v1716 = vld [vmem:[%s1706 + $0x48] sm:$0xff]
    %v1717 = vld [vmem:[%s1706 + $0x50] sm:$0xff]
    %v1718 = vld [vmem:[%s1706 + $0x58] sm:$0xff]
    %v1719 = vld [vmem:[%s1706 + $0x60] sm:$0xff]
    %v1720 = vld [vmem:[%s1706 + $0x68] sm:$0xff]
    %v1721 = vld [vmem:[%s1706 + $0x70] sm:$0xff]
    %v1722 = vld [vmem:[%s1706 + $0x78] sm:$0xff]
    %v1723 = vld [vmem:[%s1706 + $0x80] sm:$0xff]
    %v1724 = vld [vmem:[%s1706 + $0x88] sm:$0xff]
    %v1725 = vld [vmem:[%s1706 + $0x90] sm:$0xff]
    %v1726 = vld [vmem:[%s1706 + $0x98] sm:$0xff]
    %v1727 = vld [vmem:[%s1706 + $0xa0] sm:$0xff]
    %v1728 = vld [vmem:[%s1706 + $0xa8] sm:$0xff]
    %v1729 = vld [vmem:[%s1706 + $0xb0] sm:$0xff]
    %v1730 = vld [vmem:[%s1706 + $0xb8] sm:$0xff]
    %v1731 = vld [vmem:[%s1706 + $0xc0] sm:$0xff]
    %v1732 = vld [vmem:[%s1706 + $0xc8] sm:$0xff]
    %v1733 = vld [vmem:[%s1706 + $0xd0] sm:$0xff]
    %v1734 = vld [vmem:[%s1706 + $0xd8] sm:$0xff]
    %v1735 = vld [vmem:[%s1706 + $0xe0] sm:$0xff]
    %v1736 = vld [vmem:[%s1706 + $0xe8] sm:$0xff]
    %v1737 = vld [vmem:[%s1706 + $0xf0] sm:$0xff]
    %v1738 = vld [vmem:[%s1706 + $0xf8] sm:$0xff]
    %v1771 = vunpack.c.l.b16 %v1707
    %v1772 = vunpack.c.h.b16 %v1707
    %v1773 = vunpack.c.l.b16 %v1708
    %v1774 = vunpack.c.h.b16 %v1708
    %v1775 = vunpack.c.l.b16 %v1709
    %v1776 = vunpack.c.h.b16 %v1709
    %v1777 = vunpack.c.l.b16 %v1710
    %v1778 = vunpack.c.h.b16 %v1710
    %v1779 = vunpack.c.l.b16 %v1711
    %v1780 = vunpack.c.h.b16 %v1711
    %v1781 = vunpack.c.l.b16 %v1712
    %v1782 = vunpack.c.h.b16 %v1712
    %v1783 = vunpack.c.l.b16 %v1713
    %v1784 = vunpack.c.h.b16 %v1713
    %v1785 = vunpack.c.l.b16 %v1714
    %v1786 = vunpack.c.h.b16 %v1714
    %v1787 = vunpack.c.l.b16 %v1715
    %v1788 = vunpack.c.h.b16 %v1715
    %v1789 = vunpack.c.l.b16 %v1716
    %v1790 = vunpack.c.h.b16 %v1716
    %v1791 = vunpack.c.l.b16 %v1717
    %v1792 = vunpack.c.h.b16 %v1717
    %v1793 = vunpack.c.l.b16 %v1718
    %v1794 = vunpack.c.h.b16 %v1718
    %v1795 = vunpack.c.l.b16 %v1719
    %v1796 = vunpack.c.h.b16 %v1719
    %v1797 = vunpack.c.l.b16 %v1720
    %v1798 = vunpack.c.h.b16 %v1720
    %v1799 = vunpack.c.l.b16 %v1721
    %v1800 = vunpack.c.h.b16 %v1721
    %v1801 = vunpack.c.l.b16 %v1722
    %v1802 = vunpack.c.h.b16 %v1722
    %v1803 = vunpack.c.l.b16 %v1723
    %v1804 = vunpack.c.h.b16 %v1723
    %v1805 = vunpack.c.l.b16 %v1724
    %v1806 = vunpack.c.h.b16 %v1724
    %v1807 = vunpack.c.l.b16 %v1725
    %v1808 = vunpack.c.h.b16 %v1725
    %v1809 = vunpack.c.l.b16 %v1726
    %v1810 = vunpack.c.h.b16 %v1726
    %v1811 = vunpack.c.l.b16 %v1727
    %v1812 = vunpack.c.h.b16 %v1727
    %v1813 = vunpack.c.l.b16 %v1728
    %v1814 = vunpack.c.h.b16 %v1728
    %v1815 = vunpack.c.l.b16 %v1729
    %v1816 = vunpack.c.h.b16 %v1729
    %v1817 = vunpack.c.l.b16 %v1730
    %v1818 = vunpack.c.h.b16 %v1730
    %v1819 = vunpack.c.l.b16 %v1731
    %v1820 = vunpack.c.h.b16 %v1731
    %v1821 = vunpack.c.l.b16 %v1732
    %v1822 = vunpack.c.h.b16 %v1732
    %v1823 = vunpack.c.l.b16 %v1733
    %v1824 = vunpack.c.h.b16 %v1733
    %v1825 = vunpack.c.l.b16 %v1734
    %v1826 = vunpack.c.h.b16 %v1734
    %v1827 = vunpack.c.l.b16 %v1735
    %v1828 = vunpack.c.h.b16 %v1735
    %v1829 = vunpack.c.l.b16 %v1736
    %v1830 = vunpack.c.h.b16 %v1736
    %v1831 = vunpack.c.l.b16 %v1737
    %v1832 = vunpack.c.h.b16 %v1737
    %v1833 = vunpack.c.l.b16 %v1738
    %v1834 = vunpack.c.h.b16 %v1738
    %v1835 = vpack.c.b16 %v1773, %v1771
    %v1836 = vpack.c.b16 %v1774, %v1772
    %v1837 = vpack.c.b16 %v1777, %v1775
    %v1838 = vpack.c.b16 %v1778, %v1776
    %v1839 = vpack.c.b16 %v1781, %v1779
    %v1840 = vpack.c.b16 %v1782, %v1780
    %v1841 = vpack.c.b16 %v1785, %v1783
    %v1842 = vpack.c.b16 %v1786, %v1784
    %v1843 = vpack.c.b16 %v1789, %v1787
    %v1844 = vpack.c.b16 %v1790, %v1788
    %v1845 = vpack.c.b16 %v1793, %v1791
    %v1846 = vpack.c.b16 %v1794, %v1792
    %v1847 = vpack.c.b16 %v1797, %v1795
    %v1848 = vpack.c.b16 %v1798, %v1796
    %v1849 = vpack.c.b16 %v1801, %v1799
    %v1850 = vpack.c.b16 %v1802, %v1800
    %v1851 = vpack.c.b16 %v1805, %v1803
    %v1852 = vpack.c.b16 %v1806, %v1804
    %v1853 = vpack.c.b16 %v1809, %v1807
    %v1854 = vpack.c.b16 %v1810, %v1808
    %v1855 = vpack.c.b16 %v1813, %v1811
    %v1856 = vpack.c.b16 %v1814, %v1812
    %v1857 = vpack.c.b16 %v1817, %v1815
    %v1858 = vpack.c.b16 %v1818, %v1816
    %v1859 = vpack.c.b16 %v1821, %v1819
    %v1860 = vpack.c.b16 %v1822, %v1820
    %v1861 = vpack.c.b16 %v1825, %v1823
    %v1862 = vpack.c.b16 %v1826, %v1824
    %v1863 = vpack.c.b16 %v1829, %v1827
    %v1864 = vpack.c.b16 %v1830, %v1828
    %v1865 = vpack.c.b16 %v1833, %v1831
    %v1866 = vpack.c.b16 %v1834, %v1832
    %1899 = vmatprep.subr.bf16.mxu0 %v1836
    %1900 = vmatpush1.bf16.msra.mxu0 %v1835
    %1901 = vmatprep.subr.bf16.mxu0 %v1838
    %1902 = vmatpush1.bf16.msra.mxu0 %v1837
    %1903 = vmatprep.subr.bf16.mxu0 %v1840
    %1904 = vmatpush1.bf16.msra.mxu0 %v1839
    %1905 = vmatprep.subr.bf16.mxu0 %v1842
    %1906 = vmatpush1.bf16.msra.mxu0 %v1841
    %1907 = vmatprep.subr.bf16.mxu0 %v1844
    %1908 = vmatpush1.bf16.msra.mxu0 %v1843
    %1909 = vmatprep.subr.bf16.mxu0 %v1846
    %1910 = vmatpush1.bf16.msra.mxu0 %v1845
    %1911 = vmatprep.subr.bf16.mxu0 %v1848
    %1912 = vmatpush1.bf16.msra.mxu0 %v1847
    %1913 = vmatprep.subr.bf16.mxu0 %v1850
    %1914 = vmatpush1.bf16.msra.mxu0 %v1849
    %1915 = vmatprep.subr.bf16.mxu0 %v1852
    %1916 = vmatpush1.bf16.msra.mxu0 %v1851
    %1917 = vmatprep.subr.bf16.mxu0 %v1854
    %1918 = vmatpush1.bf16.msra.mxu0 %v1853
    %1919 = vmatprep.subr.bf16.mxu0 %v1856
    %1920 = vmatpush1.bf16.msra.mxu0 %v1855
    %1921 = vmatprep.subr.bf16.mxu0 %v1858
    %1922 = vmatpush1.bf16.msra.mxu0 %v1857
    %1923 = vmatprep.subr.bf16.mxu0 %v1860
    %1924 = vmatpush1.bf16.msra.mxu0 %v1859
    %1925 = vmatprep.subr.bf16.mxu0 %v1862
    %1926 = vmatpush1.bf16.msra.mxu0 %v1861
    %1927 = vmatprep.subr.bf16.mxu0 %v1864
    %1928 = vmatpush1.bf16.msra.mxu0 %v1863
    %1929 = vmatprep.subr.bf16.mxu0 %v1866
    %1930 = vmatpush1.bf16.msra.mxu0 %v1865
    %1931 = vmatprep.mubr.bf16.mxu0 %v1705
    %1932 = vmatmul.mubr.bf16.gmra.mrb[0].mxu0 %v1704
    %v1933 = vpop.f32.mrb[0].mxu0
    %v1934 = vadd.f32 0.0, %v1933
    %v1935 = vpop.f32.mrb[0].mxu0
    %v1936 = vadd.f32 0.0, %v1935
    %v1937 = vpop.f32.mrb[0].mxu0
    %v1938 = vpop.f32.mrb[0].mxu0
    %1939 = vdwg.mxu0
    %s1940 = scalar_lea.vmem [#allocation9], 256
    %v1941 = vld [vmem:[%s1940] sm:$0xff]
    %v1942 = vld [vmem:[%s1940 + $0x8] sm:$0xff]
    %v1943 = vld [vmem:[%s1940 + $0x10] sm:$0xff]
    %v1944 = vld [vmem:[%s1940 + $0x18] sm:$0xff]
    %v1945 = vld [vmem:[%s1940 + $0x20] sm:$0xff]
    %v1946 = vld [vmem:[%s1940 + $0x28] sm:$0xff]
    %v1947 = vld [vmem:[%s1940 + $0x30] sm:$0xff]
    %v1948 = vld [vmem:[%s1940 + $0x38] sm:$0xff]
    %v1949 = vld [vmem:[%s1940 + $0x40] sm:$0xff]
    %v1950 = vld [vmem:[%s1940 + $0x48] sm:$0xff]
    %v1951 = vld [vmem:[%s1940 + $0x50] sm:$0xff]
    %v1952 = vld [vmem:[%s1940 + $0x58] sm:$0xff]
    %v1953 = vld [vmem:[%s1940 + $0x60] sm:$0xff]
    %v1954 = vld [vmem:[%s1940 + $0x68] sm:$0xff]
    %v1955 = vld [vmem:[%s1940 + $0x70] sm:$0xff]
    %v1956 = vld [vmem:[%s1940 + $0x78] sm:$0xff]
    %v1957 = vld [vmem:[%s1940 + $0x80] sm:$0xff]
    %v1958 = vld [vmem:[%s1940 + $0x88] sm:$0xff]
    %v1959 = vld [vmem:[%s1940 + $0x90] sm:$0xff]
    %v1960 = vld [vmem:[%s1940 + $0x98] sm:$0xff]
    %v1961 = vld [vmem:[%s1940 + $0xa0] sm:$0xff]
    %v1962 = vld [vmem:[%s1940 + $0xa8] sm:$0xff]
    %v1963 = vld [vmem:[%s1940 + $0xb0] sm:$0xff]
    %v1964 = vld [vmem:[%s1940 + $0xb8] sm:$0xff]
    %v1965 = vld [vmem:[%s1940 + $0xc0] sm:$0xff]
    %v1966 = vld [vmem:[%s1940 + $0xc8] sm:$0xff]
    %v1967 = vld [vmem:[%s1940 + $0xd0] sm:$0xff]
    %v1968 = vld [vmem:[%s1940 + $0xd8] sm:$0xff]
    %v1969 = vld [vmem:[%s1940 + $0xe0] sm:$0xff]
    %v1970 = vld [vmem:[%s1940 + $0xe8] sm:$0xff]
    %v1971 = vld [vmem:[%s1940 + $0xf0] sm:$0xff]
    %v1972 = vld [vmem:[%s1940 + $0xf8] sm:$0xff]
    %v2005 = vunpack.c.l.b16 %v1941
    %v2006 = vunpack.c.h.b16 %v1941
    %v2007 = vunpack.c.l.b16 %v1942
    %v2008 = vunpack.c.h.b16 %v1942
    %v2009 = vunpack.c.l.b16 %v1943
    %v2010 = vunpack.c.h.b16 %v1943
    %v2011 = vunpack.c.l.b16 %v1944
    %v2012 = vunpack.c.h.b16 %v1944
    %v2013 = vunpack.c.l.b16 %v1945
    %v2014 = vunpack.c.h.b16 %v1945
    %v2015 = vunpack.c.l.b16 %v1946
    %v2016 = vunpack.c.h.b16 %v1946
    %v2017 = vunpack.c.l.b16 %v1947
    %v2018 = vunpack.c.h.b16 %v1947
    %v2019 = vunpack.c.l.b16 %v1948
    %v2020 = vunpack.c.h.b16 %v1948
    %v2021 = vunpack.c.l.b16 %v1949
    %v2022 = vunpack.c.h.b16 %v1949
    %v2023 = vunpack.c.l.b16 %v1950
    %v2024 = vunpack.c.h.b16 %v1950
    %v2025 = vunpack.c.l.b16 %v1951
    %v2026 = vunpack.c.h.b16 %v1951
    %v2027 = vunpack.c.l.b16 %v1952
    %v2028 = vunpack.c.h.b16 %v1952
    %v2029 = vunpack.c.l.b16 %v1953
    %v2030 = vunpack.c.h.b16 %v1953
    %v2031 = vunpack.c.l.b16 %v1954
    %v2032 = vunpack.c.h.b16 %v1954
    %v2033 = vunpack.c.l.b16 %v1955
    %v2034 = vunpack.c.h.b16 %v1955
    %v2035 = vunpack.c.l.b16 %v1956
    %v2036 = vunpack.c.h.b16 %v1956
    %v2037 = vunpack.c.l.b16 %v1957
    %v2038 = vunpack.c.h.b16 %v1957
    %v2039 = vunpack.c.l.b16 %v1958
    %v2040 = vunpack.c.h.b16 %v1958
    %v2041 = vunpack.c.l.b16 %v1959
    %v2042 = vunpack.c.h.b16 %v1959
    %v2043 = vunpack.c.l.b16 %v1960
    %v2044 = vunpack.c.h.b16 %v1960
    %v2045 = vunpack.c.l.b16 %v1961
    %v2046 = vunpack.c.h.b16 %v1961
    %v2047 = vunpack.c.l.b16 %v1962
    %v2048 = vunpack.c.h.b16 %v1962
    %v2049 = vunpack.c.l.b16 %v1963
    %v2050 = vunpack.c.h.b16 %v1963
    %v2051 = vunpack.c.l.b16 %v1964
    %v2052 = vunpack.c.h.b16 %v1964
    %v2053 = vunpack.c.l.b16 %v1965
    %v2054 = vunpack.c.h.b16 %v1965
    %v2055 = vunpack.c.l.b16 %v1966
    %v2056 = vunpack.c.h.b16 %v1966
    %v2057 = vunpack.c.l.b16 %v1967
    %v2058 = vunpack.c.h.b16 %v1967
    %v2059 = vunpack.c.l.b16 %v1968
    %v2060 = vunpack.c.h.b16 %v1968
    %v2061 = vunpack.c.l.b16 %v1969
    %v2062 = vunpack.c.h.b16 %v1969
    %v2063 = vunpack.c.l.b16 %v1970
    %v2064 = vunpack.c.h.b16 %v1970
    %v2065 = vunpack.c.l.b16 %v1971
    %v2066 = vunpack.c.h.b16 %v1971
    %v2067 = vunpack.c.l.b16 %v1972
    %v2068 = vunpack.c.h.b16 %v1972
    %v2069 = vpack.c.b16 %v2007, %v2005
    %v2070 = vpack.c.b16 %v2008, %v2006
    %v2071 = vpack.c.b16 %v2011, %v2009
    %v2072 = vpack.c.b16 %v2012, %v2010
    %v2073 = vpack.c.b16 %v2015, %v2013
    %v2074 = vpack.c.b16 %v2016, %v2014
    %v2075 = vpack.c.b16 %v2019, %v2017
    %v2076 = vpack.c.b16 %v2020, %v2018
    %v2077 = vpack.c.b16 %v2023, %v2021
    %v2078 = vpack.c.b16 %v2024, %v2022
    %v2079 = vpack.c.b16 %v2027, %v2025
    %v2080 = vpack.c.b16 %v2028, %v2026
    %v2081 = vpack.c.b16 %v2031, %v2029
    %v2082 = vpack.c.b16 %v2032, %v2030
    %v2083 = vpack.c.b16 %v2035, %v2033
    %v2084 = vpack.c.b16 %v2036, %v2034
    %v2085 = vpack.c.b16 %v2039, %v2037
    %v2086 = vpack.c.b16 %v2040, %v2038
    %v2087 = vpack.c.b16 %v2043, %v2041
    %v2088 = vpack.c.b16 %v2044, %v2042
    %v2089 = vpack.c.b16 %v2047, %v2045
    %v2090 = vpack.c.b16 %v2048, %v2046
    %v2091 = vpack.c.b16 %v2051, %v2049
    %v2092 = vpack.c.b16 %v2052, %v2050
    %v2093 = vpack.c.b16 %v2055, %v2053
    %v2094 = vpack.c.b16 %v2056, %v2054
    %v2095 = vpack.c.b16 %v2059, %v2057
    %v2096 = vpack.c.b16 %v2060, %v2058
    %v2097 = vpack.c.b16 %v2063, %v2061
    %v2098 = vpack.c.b16 %v2064, %v2062
    %v2099 = vpack.c.b16 %v2067, %v2065
    %v2100 = vpack.c.b16 %v2068, %v2066
    %2133 = vmatprep.subr.bf16.mxu0 %v2070
    %2134 = vmatpush1.bf16.msra.mxu0 %v2069
    %2135 = vmatprep.subr.bf16.mxu0 %v2072
    %2136 = vmatpush1.bf16.msra.mxu0 %v2071
    %2137 = vmatprep.subr.bf16.mxu0 %v2074
    %2138 = vmatpush1.bf16.msra.mxu0 %v2073
    %2139 = vmatprep.subr.bf16.mxu0 %v2076
    %2140 = vmatpush1.bf16.msra.mxu0 %v2075
    %2141 = vmatprep.subr.bf16.mxu0 %v2078
    %2142 = vmatpush1.bf16.msra.mxu0 %v2077
    %2143 = vmatprep.subr.bf16.mxu0 %v2080
    %2144 = vmatpush1.bf16.msra.mxu0 %v2079
    %2145 = vmatprep.subr.bf16.mxu0 %v2082
    %2146 = vmatpush1.bf16.msra.mxu0 %v2081
    %2147 = vmatprep.subr.bf16.mxu0 %v2084
    %2148 = vmatpush1.bf16.msra.mxu0 %v2083
    %2149 = vmatprep.subr.bf16.mxu0 %v2086
    %2150 = vmatpush1.bf16.msra.mxu0 %v2085
    %2151 = vmatprep.subr.bf16.mxu0 %v2088
    %2152 = vmatpush1.bf16.msra.mxu0 %v2087
    %2153 = vmatprep.subr.bf16.mxu0 %v2090
    %2154 = vmatpush1.bf16.msra.mxu0 %v2089
    %2155 = vmatprep.subr.bf16.mxu0 %v2092
    %2156 = vmatpush1.bf16.msra.mxu0 %v2091
    %2157 = vmatprep.subr.bf16.mxu0 %v2094
    %2158 = vmatpush1.bf16.msra.mxu0 %v2093
    %2159 = vmatprep.subr.bf16.mxu0 %v2096
    %2160 = vmatpush1.bf16.msra.mxu0 %v2095
    %2161 = vmatprep.subr.bf16.mxu0 %v2098
    %2162 = vmatpush1.bf16.msra.mxu0 %v2097
    %2163 = vmatprep.subr.bf16.mxu0 %v2100
    %2164 = vmatpush1.bf16.msra.mxu0 %v2099
    %2165 = vmatprep.mubr.bf16.mxu0 %v1705
    %2166 = vmatmul.mubr.bf16.gmra.mrb[0].mxu0 %v1704
    %v2167 = vpop.f32.mrb[0].mxu0
    %v2168 = vadd.f32 0.0, %v2167
    %v2169 = vpop.f32.mrb[0].mxu0
    %v2170 = vadd.f32 0.0, %v2169
    %v2171 = vpop.f32.mrb[0].mxu0
    %v2172 = vpop.f32.mrb[0].mxu0
    %2173 = vdwg.mxu0
    %v2176 = vrot.slane %v2168, 2
    %v2177 = vrot.slane %v2170, 2
    %v2180 = vsub.f32 %v1934, %v2176
    %v2181 = vsub.f32 %v1936, %v2177
    %v2184 = vrot.slane %v1934, 2
    %v2185 = vrot.slane %v1936, 2
    %v2188 = vadd.f32 %v2168, %v2184
    %v2189 = vadd.f32 %v2170, %v2185
    %v2190 = vmul.f32 %v2180, %v1623
    %v2191 = vmul.f32 %v2181, %v1627
    %v2192 = vmul.f32 %v2188, %v1643
    %v2193 = vmul.f32 %v2189, %v1647
    %v2194 = vsub.f32 %v2190, %v2192
    %v2195 = vsub.f32 %v2191, %v2193
    %v2196 = vmul.f32 %v2180, %v1643
    %v2197 = vmul.f32 %v2181, %v1647
    %v2198 = vmul.f32 %v2188, %v1623
    %v2199 = vmul.f32 %v2189, %v1627
    %v2200 = vadd.f32 %v2196, %v2198
    %v2201 = vadd.f32 %v2197, %v2199
    %v2202 = vmul.f32 %v2194, %v2194
    %v2203 = vmul.f32 %v2195, %v2195
    %v2204 = vmul.f32 %v2200, %v2200
    %v2205 = vmul.f32 %v2201, %v2201
    %v2206 = vadd.f32 %v2202, %v2204
    %v2207 = vadd.f32 %v2203, %v2205
    %v2208 = vrsqrt.pop %v2206
    %v2209 = vmul.f32 %v2206, %v2208
    %vm2210 = vcmp.eq.f32.partialorder %v2206, inf
    %v2211 = vsel %vm2210, %v2206, %v2209
    %vm2212 = vcmp.eq.f32.partialorder %v2206, 0.0
    %v2213 = vand.u32 %v2206, 2147483648
    %v2214 = vsel %vm2212, %v2213, %v2211
    %v2215 = vrsqrt.pop %v2207
    %v2216 = vmul.f32 %v2207, %v2215
    %vm2217 = vcmp.eq.f32.partialorder %v2207, inf
    %v2218 = vsel %vm2217, %v2207, %v2216
    %vm2219 = vcmp.eq.f32.partialorder %v2207, 0.0
    %v2220 = vand.u32 %v2207, 2147483648
    %v2221 = vsel %vm2219, %v2220, %v2218
    %s2222 = sld [smem:[#allocation11 + $0x1]]
    %v2223 = vstv %s2222
    %v2224 = vmul.f32 %v2214, %v2223
    %v2225 = vmul.f32 %v2221, %v2223
    %v2226 = vadd.f32 %v1682, %v2224
    %v2227 = vadd.f32 %v1683, %v2225
    %v2228 = vld [vmem:[#allocation12] sm:$0xff]
    %v2229 = vld [vmem:[#allocation12 + $0x8] sm:$0xff]
    %v2230 = vld [vmem:[#allocation12 + $0x10] sm:$0xff]
    %v2231 = vld [vmem:[#allocation12 + $0x18] sm:$0xff]
    %v2232 = vld [vmem:[#allocation12 + $0x20] sm:$0xff]
    %v2233 = vld [vmem:[#allocation12 + $0x28] sm:$0xff]
    %v2234 = vld [vmem:[#allocation12 + $0x30] sm:$0xff]
    %v2235 = vld [vmem:[#allocation12 + $0x38] sm:$0xff]
    %v2236 = vld [vmem:[#allocation12 + $0x40] sm:$0xff]
    %v2237 = vld [vmem:[#allocation12 + $0x48] sm:$0xff]
    %v2238 = vld [vmem:[#allocation12 + $0x50] sm:$0xff]
    %v2239 = vld [vmem:[#allocation12 + $0x58] sm:$0xff]
    %v2240 = vld [vmem:[#allocation12 + $0x60] sm:$0xff]
    %v2241 = vld [vmem:[#allocation12 + $0x68] sm:$0xff]
    %v2242 = vld [vmem:[#allocation12 + $0x70] sm:$0xff]
    %v2243 = vld [vmem:[#allocation12 + $0x78] sm:$0xff]
    %v2244 = vld [vmem:[#allocation12 + $0x80] sm:$0xff]
    %v2245 = vld [vmem:[#allocation12 + $0x88] sm:$0xff]
    %v2246 = vld [vmem:[#allocation12 + $0x90] sm:$0xff]
    %v2247 = vld [vmem:[#allocation12 + $0x98] sm:$0xff]
    %v2248 = vld [vmem:[#allocation12 + $0xa0] sm:$0xff]
    %v2249 = vld [vmem:[#allocation12 + $0xa8] sm:$0xff]
    %v2250 = vld [vmem:[#allocation12 + $0xb0] sm:$0xff]
    %v2251 = vld [vmem:[#allocation12 + $0xb8] sm:$0xff]
    %v2252 = vld [vmem:[#allocation12 + $0xc0] sm:$0xff]
    %v2253 = vld [vmem:[#allocation12 + $0xc8] sm:$0xff]
    %v2254 = vld [vmem:[#allocation12 + $0xd0] sm:$0xff]
    %v2255 = vld [vmem:[#allocation12 + $0xd8] sm:$0xff]
    %v2256 = vld [vmem:[#allocation12 + $0xe0] sm:$0xff]
    %v2257 = vld [vmem:[#allocation12 + $0xe8] sm:$0xff]
    %v2258 = vld [vmem:[#allocation12 + $0xf0] sm:$0xff]
    %v2259 = vld [vmem:[#allocation12 + $0xf8] sm:$0xff]
    %v2260 = vld [vmem:[%s8] sm:$0x1]
    %v2262 = vlaneseq
    %v2263 = vshrl.u32 %v2262, 7
    %v2264 = vsub.s32 0, %v2263
    %v2265 = vrot.slane %v2260, %v2264
    %2267 = vmatprep.subr.mxu0 0.0
    %2268 = vmatpush1.msra.mxu0 %v2228
    %2269 = vmatprep.subr.mxu0 0.0
    %2270 = vmatpush1.msra.mxu0 %v2229
    %2271 = vmatprep.subr.mxu0 0.0
    %2272 = vmatpush1.msra.mxu0 %v2230
    %2273 = vmatprep.subr.mxu0 0.0
    %2274 = vmatpush1.msra.mxu0 %v2231
    %2275 = vmatprep.subr.mxu0 0.0
    %2276 = vmatpush1.msra.mxu0 %v2232
    %2277 = vmatprep.subr.mxu0 0.0
    %2278 = vmatpush1.msra.mxu0 %v2233
    %2279 = vmatprep.subr.mxu0 0.0
    %2280 = vmatpush1.msra.mxu0 %v2234
    %2281 = vmatprep.subr.mxu0 0.0
    %2282 = vmatpush1.msra.mxu0 %v2235
    %2283 = vmatprep.subr.mxu0 0.0
    %2284 = vmatpush1.msra.mxu0 %v2236
    %2285 = vmatprep.subr.mxu0 0.0
    %2286 = vmatpush1.msra.mxu0 %v2237
    %2287 = vmatprep.subr.mxu0 0.0
    %2288 = vmatpush1.msra.mxu0 %v2238
    %2289 = vmatprep.subr.mxu0 0.0
    %2290 = vmatpush1.msra.mxu0 %v2239
    %2291 = vmatprep.subr.mxu0 0.0
    %2292 = vmatpush1.msra.mxu0 %v2240
    %2293 = vmatprep.subr.mxu0 0.0
    %2294 = vmatpush1.msra.mxu0 %v2241
    %2295 = vmatprep.subr.mxu0 0.0
    %2296 = vmatpush1.msra.mxu0 %v2242
    %2297 = vmatprep.subr.mxu0 0.0
    %2298 = vmatpush1.msra.mxu0 %v2243
    %2299 = vmatprep.subr.mxu0 0.0
    %2300 = vmatpush1.msra.mxu0 %v2244
    %2301 = vmatprep.subr.mxu0 0.0
    %2302 = vmatpush1.msra.mxu0 %v2245
    %2303 = vmatprep.subr.mxu0 0.0
    %2304 = vmatpush1.msra.mxu0 %v2246
    %2305 = vmatprep.subr.mxu0 0.0
    %2306 = vmatpush1.msra.mxu0 %v2247
    %2307 = vmatprep.subr.mxu0 0.0
    %2308 = vmatpush1.msra.mxu0 %v2248
    %2309 = vmatprep.subr.mxu0 0.0
    %2310 = vmatpush1.msra.mxu0 %v2249
    %2311 = vmatprep.subr.mxu0 0.0
    %2312 = vmatpush1.msra.mxu0 %v2250
    %2313 = vmatprep.subr.mxu0 0.0
    %2314 = vmatpush1.msra.mxu0 %v2251
    %2315 = vmatprep.subr.mxu0 0.0
    %2316 = vmatpush1.msra.mxu0 %v2252
    %2317 = vmatprep.subr.mxu0 0.0
    %2318 = vmatpush1.msra.mxu0 %v2253
    %2319 = vmatprep.subr.mxu0 0.0
    %2320 = vmatpush1.msra.mxu0 %v2254
    %2321 = vmatprep.subr.mxu0 0.0
    %2322 = vmatpush1.msra.mxu0 %v2255
    %2323 = vmatprep.subr.mxu0 0.0
    %2324 = vmatpush1.msra.mxu0 %v2256
    %2325 = vmatprep.subr.mxu0 0.0
    %2326 = vmatpush1.msra.mxu0 %v2257
    %2327 = vmatprep.subr.mxu0 0.0
    %2328 = vmatpush1.msra.mxu0 %v2258
    %2329 = vmatprep.subr.mxu0 0.0
    %2330 = vmatpush1.msra.mxu0 %v2259
    %2331 = vmatprep.mubr.f32.mxu0 %v2227
    %2332 = vmatmul.mubr.f32.gmra.mrb[0].mxu0 %v2226
    %v2333 = vpop.f32.mrb[0].mxu0
    %v2334 = vadd.f32 %v2265, %v2333
    %v2335 = vpop.f32.mrb[0].mxu0
    %2336 = vdwg.mxu0
    %2337 = vst [vmem:[#allocation13] sm:$0x3] %v2334
    // Predicated region
    $region62: #{tpu_custom_call.1} parent=1 // pred_check
      _
    $region63: #{tpu_custom_call.1} parent=1 // pred_check_branch
      %2339 = sbr.rel (0) target = $region65
    $region64: #{tpu_custom_call.1} parent=1 // pred_region
      %s2341 = ssub.s32 32, 32
      %2342 = vsyncadd [#allocation4], %s2341
      %s2344 = sshll.u32 [#allocation13], 4
      %s2345 = int_to_ptr.vmem [resolvable:$true] %s2344
      %2347 = dma.vmem_to_hbm [thread:$0]  %s2345, 32, %s9, [#allocation4]
    $region65: #{tpu_custom_call.1} parent=1 // pred_fallthru
      _
    // Predicated region
    $region66: #{tpu_custom_call.1} parent=1 // pred_check
      _
    $region67: #{tpu_custom_call.1} parent=1 // pred_check_branch
      %2349 = sbr.rel (0) target = $region69
    $region68: #{tpu_custom_call.1} parent=1 // pred_region
      %2350 = dma.done [#allocation4], 32
    $region69: #{tpu_custom_call.1} parent=1 // pred_fallthru
      _
    %2351 = vsyncpa [#allocation3], 1
    %2352 = vsyncpa [#allocation7], 1
    %2353 = vsyncpa [#allocation10], 1
    %2354 = vsyncpa [#allocation4], 1
    %2355 = vsyncpa [#allocation5], 1

</llo_original>
